<compile_context>
chip_gen: v5e
topology: v5e:2x2
jax: 0.10.0
libtpu: 0.0.40
codegen_flags: <defaults>
</compile_context>

<pallas_src>
import jax
import jax.numpy as jnp
from jax.experimental import pallas as pl
from jax.experimental.pallas import tpu as pltpu

# ------------------------- model configuration (small) -------------------------
B = 2                      # batch
C = 16                     # EEG channel count (Conv2d #2 kernel height)
T0 = 200                   # time samples; Linear(1040*(T//200), out) needs T=200
KW = 25                    # Conv2d #1 temporal kernel width
F = 40                     # conv feature channels
T1 = T0 - KW + 1           # 176, time length after conv1/conv2
POOL_W, POOL_S = 51, 5     # AvgPool2d window / stride
P = (T1 - POOL_W) // POOL_S + 1   # 26 pooled time steps
OUT_DIM = 4                # classifier output dim
BN_EPS = 1e-5

assert F * P == 1040 * (T0 // 200)   # matches nn.Linear(1040*(T//200), out_dim)


# ----------------------------------- kernel -----------------------------------
def _shallownet_kernel(xcol_ref, wfold_ref, rowpack_ref, whp_ref, mask_ref,
                       rowsel_ref, gsum_ref, o_ref):
    # ---- conv1 o conv2 folded offline into one weight matrix; here it is a
    # single bf16 MXU matmul with f32 accumulation.  M = B*T1 = 352.
    y = jnp.dot(xcol_ref[...], wfold_ref[...],
                preferred_element_type=jnp.float32)            # (B*T1, F) f32

    # ---- folded conv biases + BatchNorm2d (eval: running-stat affine), f32.
    y = y + rowpack_ref[0:1, :]
    y = y * rowpack_ref[1:2, :] + rowpack_ref[2:3, :]
    # ---- ELU (elementwise, f32; EUP exp).
    y = jnp.where(y > 0.0, y, jnp.exp(jnp.minimum(y, 0.0)) - 1.0)

    # ---- AvgPool2d + Flatten + Linear head as MXU contractions (Dropout=id):
    #   z[b*T1+t, o*P+p] = sum_g y[b*T1+t, g] * out_w[o, g*P+p]
    #   mask[b*T1+t, o*P+p] = band[p, t] / POOL_W      (pool window / average)
    #   rowsel sums over t within each batch row; gsum sums over p per output.
    z = jnp.dot(y.astype(jnp.bfloat16), whp_ref[...],
                preferred_element_type=jnp.float32)            # (B*T1, O*P) f32
    z = z * mask_ref[...]                                       # f32 elementwise
    t = jnp.dot(rowsel_ref[...], z,
                preferred_element_type=jnp.float32)            # (B, O*P)
    out = jnp.dot(t, gsum_ref[...],
                  preferred_element_type=jnp.float32)          # (B, OUT_DIM)
    o_ref[...] = out + rowpack_ref[3:4, 0:OUT_DIM]


# ------------------------------ weight preparation ------------------------------
def init_params(key):
    """Synthetic parameters in the PyTorch layouts."""
    ks = jax.random.split(key, 10)

    def nrm(k, shape, scale):
        return scale * jax.random.normal(k, shape, dtype=jnp.float32)

    return dict(
        conv1_w=nrm(ks[0], (F, 1, 1, KW), 0.1),
        conv1_b=nrm(ks[1], (F,), 0.1),
        conv2_w=nrm(ks[2], (F, F, C, 1), 0.05),
        conv2_b=nrm(ks[3], (F,), 0.1),
        bn_gamma=1.0 + 0.1 * jax.random.normal(ks[4], (F,), dtype=jnp.float32),
        bn_beta=nrm(ks[5], (F,), 0.1),
        bn_mean=nrm(ks[6], (F,), 0.1),
        bn_var=0.5 + jax.random.uniform(ks[7], (F,), dtype=jnp.float32),
        out_w=nrm(ks[8], (OUT_DIM, F * P), 0.05),
        out_b=nrm(ks[9], (OUT_DIM,), 0.1),
    )


def prepare_weights(params):
    """Fold / repack weights into kernel layouts (runs once, weights only)."""
    w1 = params['conv1_w'].reshape(F, KW)                        # (f, k)
    w2 = params['conv2_w'].reshape(F, F, C)                      # (g, f, c)

    # conv2(conv1(x)) weight fold: wfold[(k,c), g] = sum_f w2[g,f,c] * w1[f,k]
    wfold = jnp.einsum('gfc,fk->kcg', w2, w1).reshape(KW * C, F)
    bconst = params['conv2_b'] + jnp.einsum('gfc,f->g', w2, params['conv1_b'])

    bn_scale = params['bn_gamma'] * jax.lax.rsqrt(params['bn_var'] + BN_EPS)
    bn_shift = params['bn_beta'] - params['bn_mean'] * bn_scale
    brow = jnp.zeros((F,), jnp.float32).at[:OUT_DIM].set(params['out_b'])
    rowpack = jnp.stack([bconst, bn_scale, bn_shift, brow], axis=0)   # (4, F)

    # Head weight rearranged so the flatten+linear is an MXU contraction:
    # whp[g, o*P+p] = out_w[o, g*P+p]   (PyTorch flatten order is g*P + p).
    w_r = params['out_w'].reshape(OUT_DIM, F, P)                 # (o, g, p)
    whp = jnp.transpose(w_r, (1, 0, 2)).reshape(F, OUT_DIM * P)  # (F, O*P)

    # AvgPool band, applied as an elementwise mask on (y @ whp), tiled O(B)
    # over batch rows and OUT_DIM column blocks (no O(B^2) kron pool matrix).
    p_idx = jnp.arange(P)[None, :]
    t_idx = jnp.arange(T1)[:, None]
    band = ((t_idx >= POOL_S * p_idx) &
            (t_idx < POOL_S * p_idx + POOL_W)).astype(jnp.float32) / POOL_W
    mask = jnp.tile(band, (B, OUT_DIM))                          # (B*T1, O*P)

    # rowsel sums masked rows per batch; gsum sums the P columns per output.
    rowsel = jnp.kron(jnp.eye(B, dtype=jnp.float32),
                      jnp.ones((1, T1), jnp.float32))            # (B, B*T1)
    gsum = jnp.kron(jnp.eye(OUT_DIM, dtype=jnp.float32),
                    jnp.ones((P, 1), jnp.float32))               # (O*P, O)

    return dict(wfold=wfold.astype(jnp.bfloat16), rowpack=rowpack,
                whp=whp.astype(jnp.bfloat16), mask=mask,
                rowsel=rowsel, gsum=gsum)


# --------------------------------- forward ---------------------------------
@jax.jit
def shallownet_forward(x, prep):
    # x: (B, 1, C, T0) NCHW exactly as the PyTorch module expects.
    # im2col for the 1x25 temporal conv is done here (XLA strided slices):
    #   xcol[b*T1 + t, k*C + c] = x[b, 0, c, t + k]   -- lane-dense last dim 400.
    x2 = x[:, 0, :, :].astype(jnp.bfloat16)                      # (B, C, T0)
    patches = jnp.stack([x2[:, :, k:k + T1] for k in range(KW)], axis=1)
    xcol = jnp.transpose(patches, (0, 3, 1, 2)).reshape(B * T1, KW * C)

    args = (xcol, prep['wfold'], prep['rowpack'], prep['whp'],
            prep['mask'], prep['rowsel'], prep['gsum'])
    vspec = pl.BlockSpec(memory_space=pltpu.MemorySpace.VMEM)
    return pl.pallas_call(
        _shallownet_kernel,
        out_shape=jax.ShapeDtypeStruct((B, OUT_DIM), jnp.float32),
        in_specs=[vspec] * len(args),
        out_specs=vspec,
    )(*args)


# ------------------------------ pure-JAX reference ------------------------------
def reference_forward(x, params):
    dn = ('NCHW', 'OIHW', 'NCHW')
    hp = jax.lax.Precision.HIGHEST
    h = jax.lax.conv_general_dilated(x, params['conv1_w'], (1, 1), 'VALID',
                                     dimension_numbers=dn, precision=hp)
    h = h + params['conv1_b'][None, :, None, None]
    h = jax.lax.conv_general_dilated(h, params['conv2_w'], (1, 1), 'VALID',
                                     dimension_numbers=dn, precision=hp)
    h = h + params['conv2_b'][None, :, None, None]
    scale = params['bn_gamma'] / jnp.sqrt(params['bn_var'] + BN_EPS)
    shift = params['bn_beta'] - params['bn_mean'] * scale
    h = h * scale[None, :, None, None] + shift[None, :, None, None]
    h = jnp.where(h > 0.0, h, jnp.exp(jnp.minimum(h, 0.0)) - 1.0)   # ELU
    h = jax.lax.reduce_window(h, 0.0, jax.lax.add, (1, 1, 1, POOL_W),
                              (1, 1, 1, POOL_S), 'VALID') / POOL_W
    h = h.reshape(h.shape[0], -1)
    return jnp.dot(h, params['out_w'].T, precision=hp) + params['out_b']


if __name__ == "__main__":
    key = jax.random.PRNGKey(0)
    kx, kp = jax.random.split(key)
    x = jax.random.normal(kx, (B, 1, C, T0), dtype=jnp.float32)
    params = init_params(kp)
    prep = prepare_weights(params)

    out = shallownet_forward(x, prep)
    out = jax.block_until_ready(out)

    assert out.shape == (B, OUT_DIM), out.shape
    assert bool(jnp.all(jnp.isfinite(out)))

    ref = reference_forward(x, params)
    assert bool(jnp.allclose(out, ref, rtol=2e-2, atol=2e-2)), \
        float(jnp.max(jnp.abs(out - ref)))

    print("KERNEL_OK")
</pallas_src>

<mosaic_0001>
module attributes {stable_mosaic.version = 11 : i64} {
  func.func @_shallownet_kernel(%arg0: memref<352x400xbf16, #tpu.memory_space<vmem>>, %arg1: memref<400x40xbf16, #tpu.memory_space<vmem>>, %arg2: memref<4x40xf32, #tpu.memory_space<vmem>>, %arg3: memref<40x104xbf16, #tpu.memory_space<vmem>>, %arg4: memref<352x104xf32, #tpu.memory_space<vmem>>, %arg5: memref<2x352xf32, #tpu.memory_space<vmem>>, %arg6: memref<104x4xf32, #tpu.memory_space<vmem>>, %arg7: memref<2x4xf32, #tpu.memory_space<vmem>>) attributes {dimension_semantics = [], scalar_prefetch = 0 : i64, scratch_operands = 0 : i64, tpu.core_type = #tpu.core_type<tc>} {
    %c0 = arith.constant 0 : index
    %c0_0 = arith.constant 0 : index
    %0 = vector.load %arg0[%c0, %c0_0] : memref<352x400xbf16, #tpu.memory_space<vmem>>, vector<352x400xbf16>
    %c0_1 = arith.constant 0 : index
    %c0_2 = arith.constant 0 : index
    %1 = vector.load %arg1[%c0_1, %c0_2] : memref<400x40xbf16, #tpu.memory_space<vmem>>, vector<400x40xbf16>
    %cst = arith.constant dense<0.000000e+00> : vector<352x40xf32>
    %2 = tpu.matmul %0, %1, %cst {dimension_numbers = #tpu.dot_dimension_numbers<[1], [0], [0], [1], [0, 0, 1, 1], [], []>} : vector<352x400xbf16>, vector<400x40xbf16>, vector<352x40xf32> -> vector<352x40xf32>
    %c0_3 = arith.constant 0 : index
    %c0_4 = arith.constant 0 : index
    %3 = vector.load %arg2[%c0_3, %c0_4] : memref<4x40xf32, #tpu.memory_space<vmem>>, vector<1x40xf32>
    %4 = vector.broadcast %3 : vector<1x40xf32> to vector<352x40xf32>
    %5 = arith.addf %2, %4 : vector<352x40xf32>
    %c1 = arith.constant 1 : index
    %c0_5 = arith.constant 0 : index
    %6 = vector.load %arg2[%c1, %c0_5] : memref<4x40xf32, #tpu.memory_space<vmem>>, vector<1x40xf32>
    %7 = vector.broadcast %6 : vector<1x40xf32> to vector<352x40xf32>
    %8 = arith.mulf %5, %7 : vector<352x40xf32>
    %c2 = arith.constant 2 : index
    %c0_6 = arith.constant 0 : index
    %9 = vector.load %arg2[%c2, %c0_6] : memref<4x40xf32, #tpu.memory_space<vmem>>, vector<1x40xf32>
    %10 = vector.broadcast %9 : vector<1x40xf32> to vector<352x40xf32>
    %11 = arith.addf %8, %10 : vector<352x40xf32>
    %cst_7 = arith.constant 0.000000e+00 : f32
    %12 = vector.broadcast %cst_7 : f32 to vector<352x40xf32>
    %13 = arith.cmpf ogt, %11, %12 : vector<352x40xf32>
    %cst_8 = arith.constant 0.000000e+00 : f32
    %14 = vector.broadcast %cst_8 : f32 to vector<352x40xf32>
    %15 = arith.minimumf %11, %14 : vector<352x40xf32>
    %16 = math.exp %15 : vector<352x40xf32>
    %cst_9 = arith.constant 1.000000e+00 : f32
    %17 = vector.broadcast %cst_9 : f32 to vector<352x40xf32>
    %18 = arith.subf %16, %17 : vector<352x40xf32>
    %19 = arith.select %13, %11, %18 : vector<352x40xi1>, vector<352x40xf32>
    %20 = arith.truncf %19 : vector<352x40xf32> to vector<352x40xbf16>
    %c0_10 = arith.constant 0 : index
    %c0_11 = arith.constant 0 : index
    %21 = vector.load %arg3[%c0_10, %c0_11] : memref<40x104xbf16, #tpu.memory_space<vmem>>, vector<40x104xbf16>
    %cst_12 = arith.constant dense<0.000000e+00> : vector<352x104xf32>
    %22 = tpu.matmul %20, %21, %cst_12 {dimension_numbers = #tpu.dot_dimension_numbers<[1], [0], [0], [1], [0, 0, 1, 1], [], []>} : vector<352x40xbf16>, vector<40x104xbf16>, vector<352x104xf32> -> vector<352x104xf32>
    %c0_13 = arith.constant 0 : index
    %c0_14 = arith.constant 0 : index
    %23 = vector.load %arg4[%c0_13, %c0_14] : memref<352x104xf32, #tpu.memory_space<vmem>>, vector<352x104xf32>
    %24 = arith.mulf %22, %23 : vector<352x104xf32>
    %c0_15 = arith.constant 0 : index
    %c0_16 = arith.constant 0 : index
    %25 = vector.load %arg5[%c0_15, %c0_16] : memref<2x352xf32, #tpu.memory_space<vmem>>, vector<2x352xf32>
    %cst_17 = arith.constant dense<0.000000e+00> : vector<2x104xf32>
    %26 = tpu.matmul %25, %24, %cst_17 {dimension_numbers = #tpu.dot_dimension_numbers<[1], [0], [0], [1], [0, 0, 1, 1], [], []>} : vector<2x352xf32>, vector<352x104xf32>, vector<2x104xf32> -> vector<2x104xf32>
    %c0_18 = arith.constant 0 : index
    %c0_19 = arith.constant 0 : index
    %27 = vector.load %arg6[%c0_18, %c0_19] : memref<104x4xf32, #tpu.memory_space<vmem>>, vector<104x4xf32>
    %cst_20 = arith.constant dense<0.000000e+00> : vector<2x4xf32>
    %28 = tpu.matmul %26, %27, %cst_20 {dimension_numbers = #tpu.dot_dimension_numbers<[1], [0], [0], [1], [0, 0, 1, 1], [], []>} : vector<2x104xf32>, vector<104x4xf32>, vector<2x4xf32> -> vector<2x4xf32>
    %c3 = arith.constant 3 : index
    %c0_21 = arith.constant 0 : index
    %29 = vector.load %arg2[%c3, %c0_21] : memref<4x40xf32, #tpu.memory_space<vmem>>, vector<1x4xf32>
    %30 = vector.broadcast %29 : vector<1x4xf32> to vector<2x4xf32>
    %31 = arith.addf %28, %30 : vector<2x4xf32>
    %c0_22 = arith.constant 0 : index
    %c0_23 = arith.constant 0 : index
    %32 = vector.load %arg7[%c0_22, %c0_23] : memref<2x4xf32, #tpu.memory_space<vmem>>, vector<2x4xf32>
    tpu.vector_store %arg7[%c0_22, %c0_23], %31 {strides = array<i32>} : memref<2x4xf32, #tpu.memory_space<vmem>>, vector<2x4xf32>,
    return
  }
}

</mosaic_0001>

<llo_original>
// kernel: shallownet_forward.1
$region0: #{shallownet_forward.1}
  #allocation0 [shape = 'u32[]', space=smem, size = 0x4, offset = 0x4, fixed_abs, tag = 'smem constant byte address 0x4 - core index']
  #allocation1 [shape = 'u32[72,128]{1,0:T(1,128)}', space=vmem, size = 0x9000, scoped, tag = 'internal scratch']
  %s0 = inlined_call_operand.vmem [shape: bf16[352,400], index: 0, kind: input, shape index: {}]
  %s1 = inlined_call_operand.vmem [shape: bf16[400,40], index: 1, kind: input, shape index: {}]
  %s2 = inlined_call_operand.vmem [shape: f32[4,40], index: 2, kind: input, shape index: {}]
  %s3 = inlined_call_operand.vmem [shape: bf16[40,104], index: 3, kind: input, shape index: {}]
  %s4 = inlined_call_operand.vmem [shape: f32[352,104], index: 4, kind: input, shape index: {}]
  %s5 = inlined_call_operand.vmem [shape: f32[2,352], index: 5, kind: input, shape index: {}]
  %s6 = inlined_call_operand.vmem [shape: f32[104,4], index: 6, kind: input, shape index: {}]
  %s7 = inlined_call_operand.hbm [shape: f32[2,4], index: 7, kind: output, shape index: {}]
  %s8 = sld [smem:[#allocation0]]
  $region38: #{shallownet_forward.1} parent=0
    _
  %s10 = ssub.s32 1, %s8
  %s11 = scalar_select 0, %s10, %s8
  $region1: #{shallownet_forward.1} parent=0
    #allocation2 [shape = 'u8[1024]{0}', space=vmem, size = 0x400, scoped, tag = 'output window, operand 0, single buffered']
    #allocation3 [shape = 's32[1]{0}', space=sflag, size = 0x4, scoped, tag = 'scoped memory for shallownet_forward.1']
    %12 = vsyncpa [#allocation3], 0
    // Predicated region
    $region2: #{shallownet_forward.1} parent=1 // pred_check
      _
    $region3: #{shallownet_forward.1} parent=1 // pred_check_branch
      %14 = sbr.rel (0) target = $region5
    $region4: #{shallownet_forward.1} parent=1 // pred_region
      _
    $region5: #{shallownet_forward.1} parent=1 // pred_fallthru
      _
    // Predicated region
    $region6: #{shallownet_forward.1} parent=1 // pred_check
      _
    $region7: #{shallownet_forward.1} parent=1 // pred_check_branch
      %16 = sbr.rel (0) target = $region9
    $region8: #{shallownet_forward.1} parent=1 // pred_region
      _
    $region9: #{shallownet_forward.1} parent=1 // pred_fallthru
      _
    // Predicated region
    $region10: #{shallownet_forward.1} parent=1 // pred_check
      _
    $region11: #{shallownet_forward.1} parent=1 // pred_check_branch
      %18 = sbr.rel (0) target = $region13
    $region12: #{shallownet_forward.1} parent=1 // pred_region
      _
    $region13: #{shallownet_forward.1} parent=1 // pred_fallthru
      _
    // Predicated region
    $region14: #{shallownet_forward.1} parent=1 // pred_check
      _
    $region15: #{shallownet_forward.1} parent=1 // pred_check_branch
      %20 = sbr.rel (0) target = $region17
    $region16: #{shallownet_forward.1} parent=1 // pred_region
      _
    $region17: #{shallownet_forward.1} parent=1 // pred_fallthru
      _
    // Predicated region
    $region18: #{shallownet_forward.1} parent=1 // pred_check
      _
    $region19: #{shallownet_forward.1} parent=1 // pred_check_branch
      %22 = sbr.rel (0) target = $region21
    $region20: #{shallownet_forward.1} parent=1 // pred_region
      _
    $region21: #{shallownet_forward.1} parent=1 // pred_fallthru
      _
    // Predicated region
    $region22: #{shallownet_forward.1} parent=1 // pred_check
      _
    $region23: #{shallownet_forward.1} parent=1 // pred_check_branch
      %24 = sbr.rel (0) target = $region25
    $region24: #{shallownet_forward.1} parent=1 // pred_region
      _
    $region25: #{shallownet_forward.1} parent=1 // pred_fallthru
      _
    // Predicated region
    $region26: #{shallownet_forward.1} parent=1 // pred_check
      _
    $region27: #{shallownet_forward.1} parent=1 // pred_check_branch
      %26 = sbr.rel (0) target = $region29
    $region28: #{shallownet_forward.1} parent=1 // pred_region
      _
    $region29: #{shallownet_forward.1} parent=1 // pred_fallthru
      _
    %v28 = vld [vmem:[%s0] sm:$0xff]
    %v29 = vld [vmem:[%s0 + $0x8] sm:$0xff]
    %v30 = vld [vmem:[%s0 + $0x10] sm:$0xff]
    %v31 = vld [vmem:[%s0 + $0x18] sm:$0xff]
    %v32 = vld [vmem:[%s0 + $0x20] sm:$0xff]
    %v33 = vld [vmem:[%s0 + $0x28] sm:$0xff]
    %v34 = vld [vmem:[%s0 + $0x30] sm:$0xff]
    %v35 = vld [vmem:[%s0 + $0x38] sm:$0xff]
    %v36 = vld [vmem:[%s0 + $0x40] sm:$0xff]
    %v37 = vld [vmem:[%s0 + $0x48] sm:$0xff]
    %v38 = vld [vmem:[%s0 + $0x50] sm:$0xff]
    %v39 = vld [vmem:[%s0 + $0x58] sm:$0xff]
    %v40 = vld [vmem:[%s0 + $0x60] sm:$0xff]
    %v41 = vld [vmem:[%s0 + $0x68] sm:$0xff]
    %v42 = vld [vmem:[%s0 + $0x70] sm:$0xff]
    %v43 = vld [vmem:[%s0 + $0x78] sm:$0xff]
    %v44 = vld [vmem:[%s0 + $0x80] sm:$0xff]
    %v45 = vld [vmem:[%s0 + $0x88] sm:$0xff]
    %v46 = vld [vmem:[%s0 + $0x90] sm:$0xff]
    %v47 = vld [vmem:[%s0 + $0x98] sm:$0xff]
    %v48 = vld [vmem:[%s0 + $0xa0] sm:$0xff]
    %v49 = vld [vmem:[%s0 + $0xa8] sm:$0xff]
    %v50 = vld [vmem:[%s0 + $0xb0] sm:$0xff]
    %v51 = vld [vmem:[%s0 + $0xb8] sm:$0xff]
    %v52 = vld [vmem:[%s0 + $0xc0] sm:$0xff]
    %v53 = vld [vmem:[%s0 + $0xc8] sm:$0xff]
    %v54 = vld [vmem:[%s0 + $0xd0] sm:$0xff]
    %v55 = vld [vmem:[%s0 + $0xd8] sm:$0xff]
    %v56 = vld [vmem:[%s0 + $0xe0] sm:$0xff]
    %v57 = vld [vmem:[%s0 + $0xe8] sm:$0xff]
    %v58 = vld [vmem:[%s0 + $0xf0] sm:$0xff]
    %v59 = vld [vmem:[%s0 + $0xf8] sm:$0xff]
    %v60 = vld [vmem:[%s0 + $0x100] sm:$0xff]
    %v61 = vld [vmem:[%s0 + $0x108] sm:$0xff]
    %v62 = vld [vmem:[%s0 + $0x110] sm:$0xff]
    %v63 = vld [vmem:[%s0 + $0x118] sm:$0xff]
    %v64 = vld [vmem:[%s0 + $0x120] sm:$0xff]
    %v65 = vld [vmem:[%s0 + $0x128] sm:$0xff]
    %v66 = vld [vmem:[%s0 + $0x130] sm:$0xff]
    %v67 = vld [vmem:[%s0 + $0x138] sm:$0xff]
    %v68 = vld [vmem:[%s0 + $0x140] sm:$0xff]
    %v69 = vld [vmem:[%s0 + $0x148] sm:$0xff]
    %v70 = vld [vmem:[%s0 + $0x150] sm:$0xff]
    %v71 = vld [vmem:[%s0 + $0x158] sm:$0xff]
    %v72 = vld [vmem:[%s0 + $0x160] sm:$0xff]
    %v73 = vld [vmem:[%s0 + $0x168] sm:$0xff]
    %v74 = vld [vmem:[%s0 + $0x170] sm:$0xff]
    %v75 = vld [vmem:[%s0 + $0x178] sm:$0xff]
    %v76 = vld [vmem:[%s0 + $0x180] sm:$0xff]
    %v77 = vld [vmem:[%s0 + $0x188] sm:$0xff]
    %v78 = vld [vmem:[%s0 + $0x190] sm:$0xff]
    %v79 = vld [vmem:[%s0 + $0x198] sm:$0xff]
    %v80 = vld [vmem:[%s0 + $0x1a0] sm:$0xff]
    %v81 = vld [vmem:[%s0 + $0x1a8] sm:$0xff]
    %v82 = vld [vmem:[%s0 + $0x1b0] sm:$0xff]
    %v83 = vld [vmem:[%s0 + $0x1b8] sm:$0xff]
    %v84 = vld [vmem:[%s0 + $0x1c0] sm:$0xff]
    %v85 = vld [vmem:[%s0 + $0x1c8] sm:$0xff]
    %v86 = vld [vmem:[%s0 + $0x1d0] sm:$0xff]
    %v87 = vld [vmem:[%s0 + $0x1d8] sm:$0xff]
    %v88 = vld [vmem:[%s0 + $0x1e0] sm:$0xff]
    %v89 = vld [vmem:[%s0 + $0x1e8] sm:$0xff]
    %v90 = vld [vmem:[%s0 + $0x1f0] sm:$0xff]
    %v91 = vld [vmem:[%s0 + $0x1f8] sm:$0xff]
    %v92 = vld [vmem:[%s0 + $0x200] sm:$0xff]
    %v93 = vld [vmem:[%s0 + $0x208] sm:$0xff]
    %v94 = vld [vmem:[%s0 + $0x210] sm:$0xff]
    %v95 = vld [vmem:[%s0 + $0x218] sm:$0xff]
    %v96 = vld [vmem:[%s0 + $0x220] sm:$0xff]
    %v97 = vld [vmem:[%s0 + $0x228] sm:$0xff]
    %v98 = vld [vmem:[%s0 + $0x230] sm:$0xff]
    %v99 = vld [vmem:[%s0 + $0x238] sm:$0xff]
    %v100 = vld [vmem:[%s0 + $0x240] sm:$0xff]
    %v101 = vld [vmem:[%s0 + $0x248] sm:$0xff]
    %v102 = vld [vmem:[%s0 + $0x250] sm:$0xff]
    %v103 = vld [vmem:[%s0 + $0x258] sm:$0xff]
    %v104 = vld [vmem:[%s0 + $0x260] sm:$0xff]
    %v105 = vld [vmem:[%s0 + $0x268] sm:$0xff]
    %v106 = vld [vmem:[%s0 + $0x270] sm:$0xff]
    %v107 = vld [vmem:[%s0 + $0x278] sm:$0xff]
    %v108 = vld [vmem:[%s0 + $0x280] sm:$0xff]
    %v109 = vld [vmem:[%s0 + $0x288] sm:$0xff]
    %v110 = vld [vmem:[%s0 + $0x290] sm:$0xff]
    %v111 = vld [vmem:[%s0 + $0x298] sm:$0xff]
    %v112 = vld [vmem:[%s0 + $0x2a0] sm:$0xff]
    %v113 = vld [vmem:[%s0 + $0x2a8] sm:$0xff]
    %v114 = vld [vmem:[%s0 + $0x2b0] sm:$0xff]
    %v115 = vld [vmem:[%s0 + $0x2b8] sm:$0xff]
    %v116 = vld [vmem:[%s1] sm:$0xf]
    %v117 = vld [vmem:[%s1 + $0x4] sm:$0xf]
    %v118 = vld [vmem:[%s1 + $0x8] sm:$0xf]
    %v119 = vld [vmem:[%s1 + $0xc] sm:$0xf]
    %v120 = vld [vmem:[%s1 + $0x10] sm:$0xf]
    %v121 = vld [vmem:[%s1 + $0x14] sm:$0xf]
    %v122 = vld [vmem:[%s1 + $0x18] sm:$0xf]
    %v123 = vld [vmem:[%s1 + $0x1c] sm:$0xf]
    %v124 = vld [vmem:[%s1 + $0x20] sm:$0xf]
    %v125 = vld [vmem:[%s1 + $0x24] sm:$0xf]
    %v126 = vld [vmem:[%s1 + $0x28] sm:$0xf]
    %v127 = vld [vmem:[%s1 + $0x2c] sm:$0xf]
    %v128 = vld [vmem:[%s1 + $0x30] sm:$0xf]
    %v129 = vld [vmem:[%s1 + $0x34] sm:$0xf]
    %v130 = vld [vmem:[%s1 + $0x38] sm:$0xf]
    %v131 = vld [vmem:[%s1 + $0x3c] sm:$0xf]
    %v132 = vld [vmem:[%s1 + $0x40] sm:$0xf]
    %v133 = vld [vmem:[%s1 + $0x44] sm:$0xf]
    %v134 = vld [vmem:[%s1 + $0x48] sm:$0xf]
    %v135 = vld [vmem:[%s1 + $0x4c] sm:$0xf]
    %v136 = vld [vmem:[%s1 + $0x50] sm:$0xf]
    %v137 = vld [vmem:[%s1 + $0x54] sm:$0xf]
    %v138 = vld [vmem:[%s1 + $0x58] sm:$0xf]
    %v139 = vld [vmem:[%s1 + $0x5c] sm:$0xf]
    %v140 = vld [vmem:[%s1 + $0x60] sm:$0xf]
    %v141 = vld [vmem:[%s1 + $0x64] sm:$0xf]
    %v142 = vld [vmem:[%s1 + $0x68] sm:$0xf]
    %v143 = vld [vmem:[%s1 + $0x6c] sm:$0xf]
    %v144 = vld [vmem:[%s1 + $0x70] sm:$0xf]
    %v145 = vld [vmem:[%s1 + $0x74] sm:$0xf]
    %v146 = vld [vmem:[%s1 + $0x78] sm:$0xf]
    %v147 = vld [vmem:[%s1 + $0x7c] sm:$0xf]
    %v148 = vld [vmem:[%s1 + $0x80] sm:$0xf]
    %v149 = vld [vmem:[%s1 + $0x84] sm:$0xf]
    %v150 = vld [vmem:[%s1 + $0x88] sm:$0xf]
    %v151 = vld [vmem:[%s1 + $0x8c] sm:$0xf]
    %v152 = vld [vmem:[%s1 + $0x90] sm:$0xf]
    %v153 = vld [vmem:[%s1 + $0x94] sm:$0xf]
    %v154 = vld [vmem:[%s1 + $0x98] sm:$0xf]
    %v155 = vld [vmem:[%s1 + $0x9c] sm:$0xf]
    %v156 = vld [vmem:[%s1 + $0xa0] sm:$0xf]
    %v157 = vld [vmem:[%s1 + $0xa4] sm:$0xf]
    %v158 = vld [vmem:[%s1 + $0xa8] sm:$0xf]
    %v159 = vld [vmem:[%s1 + $0xac] sm:$0xf]
    %v160 = vld [vmem:[%s1 + $0xb0] sm:$0xf]
    %v161 = vld [vmem:[%s1 + $0xb4] sm:$0xf]
    %v162 = vld [vmem:[%s1 + $0xb8] sm:$0xf]
    %v163 = vld [vmem:[%s1 + $0xbc] sm:$0xf]
    %v164 = vld [vmem:[%s1 + $0xc0] sm:$0xf]
    %v165 = vld [vmem:[%s1 + $0xc4] sm:$0xf]
    %v166 = vld [vmem:[%s2] sm:$0x1]
    %v167 = vperm.slane %v166, 0
    %v256 = vunpack.c.l.b16 %v28
    %v257 = vunpack.c.h.b16 %v28
    %v258 = vunpack.c.l.b16 %v29
    %v259 = vunpack.c.h.b16 %v29
    %v260 = vunpack.c.l.b16 %v30
    %v261 = vunpack.c.h.b16 %v30
    %v262 = vunpack.c.l.b16 %v31
    %v263 = vunpack.c.h.b16 %v31
    %v264 = vunpack.c.l.b16 %v32
    %v265 = vunpack.c.h.b16 %v32
    %v266 = vunpack.c.l.b16 %v33
    %v267 = vunpack.c.h.b16 %v33
    %v268 = vunpack.c.l.b16 %v34
    %v269 = vunpack.c.h.b16 %v34
    %v270 = vunpack.c.l.b16 %v35
    %v271 = vunpack.c.h.b16 %v35
    %v272 = vunpack.c.l.b16 %v36
    %v273 = vunpack.c.h.b16 %v36
    %v274 = vunpack.c.l.b16 %v37
    %v275 = vunpack.c.h.b16 %v37
    %v276 = vunpack.c.l.b16 %v38
    %v277 = vunpack.c.h.b16 %v38
    %v278 = vunpack.c.l.b16 %v39
    %v279 = vunpack.c.h.b16 %v39
    %v280 = vunpack.c.l.b16 %v40
    %v281 = vunpack.c.h.b16 %v40
    %v282 = vunpack.c.l.b16 %v41
    %v283 = vunpack.c.h.b16 %v41
    %v284 = vunpack.c.l.b16 %v42
    %v285 = vunpack.c.h.b16 %v42
    %v286 = vunpack.c.l.b16 %v43
    %v287 = vunpack.c.h.b16 %v43
    %v288 = vunpack.c.l.b16 %v44
    %v289 = vunpack.c.h.b16 %v44
    %v290 = vunpack.c.l.b16 %v45
    %v291 = vunpack.c.h.b16 %v45
    %v292 = vunpack.c.l.b16 %v46
    %v293 = vunpack.c.h.b16 %v46
    %v294 = vunpack.c.l.b16 %v47
    %v295 = vunpack.c.h.b16 %v47
    %v296 = vunpack.c.l.b16 %v48
    %v297 = vunpack.c.h.b16 %v48
    %v298 = vunpack.c.l.b16 %v49
    %v299 = vunpack.c.h.b16 %v49
    %v300 = vunpack.c.l.b16 %v50
    %v301 = vunpack.c.h.b16 %v50
    %v302 = vunpack.c.l.b16 %v51
    %v303 = vunpack.c.h.b16 %v51
    %v304 = vunpack.c.l.b16 %v52
    %v305 = vunpack.c.h.b16 %v52
    %v306 = vunpack.c.l.b16 %v53
    %v307 = vunpack.c.h.b16 %v53
    %v308 = vunpack.c.l.b16 %v54
    %v309 = vunpack.c.h.b16 %v54
    %v310 = vunpack.c.l.b16 %v55
    %v311 = vunpack.c.h.b16 %v55
    %v312 = vunpack.c.l.b16 %v56
    %v313 = vunpack.c.h.b16 %v56
    %v314 = vunpack.c.l.b16 %v57
    %v315 = vunpack.c.h.b16 %v57
    %v316 = vunpack.c.l.b16 %v58
    %v317 = vunpack.c.h.b16 %v58
    %v318 = vunpack.c.l.b16 %v59
    %v319 = vunpack.c.h.b16 %v59
    %v320 = vunpack.c.l.b16 %v60
    %v321 = vunpack.c.h.b16 %v60
    %v322 = vunpack.c.l.b16 %v61
    %v323 = vunpack.c.h.b16 %v61
    %v324 = vunpack.c.l.b16 %v62
    %v325 = vunpack.c.h.b16 %v62
    %v326 = vunpack.c.l.b16 %v63
    %v327 = vunpack.c.h.b16 %v63
    %v328 = vunpack.c.l.b16 %v64
    %v329 = vunpack.c.h.b16 %v64
    %v330 = vunpack.c.l.b16 %v65
    %v331 = vunpack.c.h.b16 %v65
    %v332 = vunpack.c.l.b16 %v66
    %v333 = vunpack.c.h.b16 %v66
    %v334 = vunpack.c.l.b16 %v67
    %v335 = vunpack.c.h.b16 %v67
    %v336 = vunpack.c.l.b16 %v68
    %v337 = vunpack.c.h.b16 %v68
    %v338 = vunpack.c.l.b16 %v69
    %v339 = vunpack.c.h.b16 %v69
    %v340 = vunpack.c.l.b16 %v70
    %v341 = vunpack.c.h.b16 %v70
    %v342 = vunpack.c.l.b16 %v71
    %v343 = vunpack.c.h.b16 %v71
    %v344 = vunpack.c.l.b16 %v72
    %v345 = vunpack.c.h.b16 %v72
    %v346 = vunpack.c.l.b16 %v73
    %v347 = vunpack.c.h.b16 %v73
    %v348 = vunpack.c.l.b16 %v74
    %v349 = vunpack.c.h.b16 %v74
    %v350 = vunpack.c.l.b16 %v75
    %v351 = vunpack.c.h.b16 %v75
    %v352 = vunpack.c.l.b16 %v76
    %v353 = vunpack.c.h.b16 %v76
    %v354 = vunpack.c.l.b16 %v77
    %v355 = vunpack.c.h.b16 %v77
    %v356 = vunpack.c.l.b16 %v78
    %v357 = vunpack.c.h.b16 %v78
    %v358 = vunpack.c.l.b16 %v79
    %v359 = vunpack.c.h.b16 %v79
    %v360 = vunpack.c.l.b16 %v80
    %v361 = vunpack.c.h.b16 %v80
    %v362 = vunpack.c.l.b16 %v81
    %v363 = vunpack.c.h.b16 %v81
    %v364 = vunpack.c.l.b16 %v82
    %v365 = vunpack.c.h.b16 %v82
    %v366 = vunpack.c.l.b16 %v83
    %v367 = vunpack.c.h.b16 %v83
    %v368 = vunpack.c.l.b16 %v84
    %v369 = vunpack.c.h.b16 %v84
    %v370 = vunpack.c.l.b16 %v85
    %v371 = vunpack.c.h.b16 %v85
    %v372 = vunpack.c.l.b16 %v86
    %v373 = vunpack.c.h.b16 %v86
    %v374 = vunpack.c.l.b16 %v87
    %v375 = vunpack.c.h.b16 %v87
    %v376 = vunpack.c.l.b16 %v88
    %v377 = vunpack.c.h.b16 %v88
    %v378 = vunpack.c.l.b16 %v89
    %v379 = vunpack.c.h.b16 %v89
    %v380 = vunpack.c.l.b16 %v90
    %v381 = vunpack.c.h.b16 %v90
    %v382 = vunpack.c.l.b16 %v91
    %v383 = vunpack.c.h.b16 %v91
    %v384 = vunpack.c.l.b16 %v92
    %v385 = vunpack.c.h.b16 %v92
    %v386 = vunpack.c.l.b16 %v93
    %v387 = vunpack.c.h.b16 %v93
    %v388 = vunpack.c.l.b16 %v94
    %v389 = vunpack.c.h.b16 %v94
    %v390 = vunpack.c.l.b16 %v95
    %v391 = vunpack.c.h.b16 %v95
    %v392 = vunpack.c.l.b16 %v96
    %v393 = vunpack.c.h.b16 %v96
    %v394 = vunpack.c.l.b16 %v97
    %v395 = vunpack.c.h.b16 %v97
    %v396 = vunpack.c.l.b16 %v98
    %v397 = vunpack.c.h.b16 %v98
    %v398 = vunpack.c.l.b16 %v99
    %v399 = vunpack.c.h.b16 %v99
    %v400 = vunpack.c.l.b16 %v100
    %v401 = vunpack.c.h.b16 %v100
    %v402 = vunpack.c.l.b16 %v101
    %v403 = vunpack.c.h.b16 %v101
    %v404 = vunpack.c.l.b16 %v102
    %v405 = vunpack.c.h.b16 %v102
    %v406 = vunpack.c.l.b16 %v103
    %v407 = vunpack.c.h.b16 %v103
    %v408 = vunpack.c.l.b16 %v104
    %v409 = vunpack.c.h.b16 %v104
    %v410 = vunpack.c.l.b16 %v105
    %v411 = vunpack.c.h.b16 %v105
    %v412 = vunpack.c.l.b16 %v106
    %v413 = vunpack.c.h.b16 %v106
    %v414 = vunpack.c.l.b16 %v107
    %v415 = vunpack.c.h.b16 %v107
    %v416 = vunpack.c.l.b16 %v108
    %v417 = vunpack.c.h.b16 %v108
    %v418 = vunpack.c.l.b16 %v109
    %v419 = vunpack.c.h.b16 %v109
    %v420 = vunpack.c.l.b16 %v110
    %v421 = vunpack.c.h.b16 %v110
    %v422 = vunpack.c.l.b16 %v111
    %v423 = vunpack.c.h.b16 %v111
    %v424 = vunpack.c.l.b16 %v112
    %v425 = vunpack.c.h.b16 %v112
    %v426 = vunpack.c.l.b16 %v113
    %v427 = vunpack.c.h.b16 %v113
    %v428 = vunpack.c.l.b16 %v114
    %v429 = vunpack.c.h.b16 %v114
    %v430 = vunpack.c.l.b16 %v115
    %v431 = vunpack.c.h.b16 %v115
    %v432 = vpack.c.b16 %v260, %v256
    %v433 = vpack.c.b16 %v261, %v257
    %v434 = vpack.c.b16 %v262, %v258
    %v435 = vpack.c.b16 %v263, %v259
    %v436 = vpack.c.b16 %v268, %v264
    %v437 = vpack.c.b16 %v269, %v265
    %v438 = vpack.c.b16 %v270, %v266
    %v439 = vpack.c.b16 %v271, %v267
    %v440 = vpack.c.b16 %v276, %v272
    %v441 = vpack.c.b16 %v277, %v273
    %v442 = vpack.c.b16 %v278, %v274
    %v443 = vpack.c.b16 %v279, %v275
    %v444 = vpack.c.b16 %v284, %v280
    %v445 = vpack.c.b16 %v285, %v281
    %v446 = vpack.c.b16 %v286, %v282
    %v447 = vpack.c.b16 %v287, %v283
    %v448 = vpack.c.b16 %v292, %v288
    %v449 = vpack.c.b16 %v293, %v289
    %v450 = vpack.c.b16 %v294, %v290
    %v451 = vpack.c.b16 %v295, %v291
    %v452 = vpack.c.b16 %v300, %v296
    %v453 = vpack.c.b16 %v301, %v297
    %v454 = vpack.c.b16 %v302, %v298
    %v455 = vpack.c.b16 %v303, %v299
    %v456 = vpack.c.b16 %v308, %v304
    %v457 = vpack.c.b16 %v309, %v305
    %v458 = vpack.c.b16 %v310, %v306
    %v459 = vpack.c.b16 %v311, %v307
    %v460 = vpack.c.b16 %v316, %v312
    %v461 = vpack.c.b16 %v317, %v313
    %v462 = vpack.c.b16 %v318, %v314
    %v463 = vpack.c.b16 %v319, %v315
    %v464 = vpack.c.b16 %v324, %v320
    %v465 = vpack.c.b16 %v325, %v321
    %v466 = vpack.c.b16 %v326, %v322
    %v467 = vpack.c.b16 %v327, %v323
    %v468 = vpack.c.b16 %v332, %v328
    %v469 = vpack.c.b16 %v333, %v329
    %v470 = vpack.c.b16 %v334, %v330
    %v471 = vpack.c.b16 %v335, %v331
    %v472 = vpack.c.b16 %v340, %v336
    %v473 = vpack.c.b16 %v341, %v337
    %v474 = vpack.c.b16 %v342, %v338
    %v475 = vpack.c.b16 %v343, %v339
    %v476 = vpack.c.b16 %v348, %v344
    %v477 = vpack.c.b16 %v349, %v345
    %v478 = vpack.c.b16 %v350, %v346
    %v479 = vpack.c.b16 %v351, %v347
    %v480 = vpack.c.b16 %v356, %v352
    %v481 = vpack.c.b16 %v357, %v353
    %v482 = vpack.c.b16 %v358, %v354
    %v483 = vpack.c.b16 %v359, %v355
    %v484 = vpack.c.b16 %v364, %v360
    %v485 = vpack.c.b16 %v365, %v361
    %v486 = vpack.c.b16 %v366, %v362
    %v487 = vpack.c.b16 %v367, %v363
    %v488 = vpack.c.b16 %v372, %v368
    %v489 = vpack.c.b16 %v373, %v369
    %v490 = vpack.c.b16 %v374, %v370
    %v491 = vpack.c.b16 %v375, %v371
    %v492 = vpack.c.b16 %v380, %v376
    %v493 = vpack.c.b16 %v381, %v377
    %v494 = vpack.c.b16 %v382, %v378
    %v495 = vpack.c.b16 %v383, %v379
    %v496 = vpack.c.b16 %v388, %v384
    %v497 = vpack.c.b16 %v389, %v385
    %v498 = vpack.c.b16 %v390, %v386
    %v499 = vpack.c.b16 %v391, %v387
    %v500 = vpack.c.b16 %v396, %v392
    %v501 = vpack.c.b16 %v397, %v393
    %v502 = vpack.c.b16 %v398, %v394
    %v503 = vpack.c.b16 %v399, %v395
    %v504 = vpack.c.b16 %v404, %v400
    %v505 = vpack.c.b16 %v405, %v401
    %v506 = vpack.c.b16 %v406, %v402
    %v507 = vpack.c.b16 %v407, %v403
    %v508 = vpack.c.b16 %v412, %v408
    %v509 = vpack.c.b16 %v413, %v409
    %v510 = vpack.c.b16 %v414, %v410
    %v511 = vpack.c.b16 %v415, %v411
    %v512 = vpack.c.b16 %v420, %v416
    %v513 = vpack.c.b16 %v421, %v417
    %v514 = vpack.c.b16 %v422, %v418
    %v515 = vpack.c.b16 %v423, %v419
    %v516 = vpack.c.b16 %v428, %v424
    %v517 = vpack.c.b16 %v429, %v425
    %v518 = vpack.c.b16 %v430, %v426
    %v519 = vpack.c.b16 %v431, %v427
    %v636 = vunpack.c.l.b16 %v116
    %v637 = vunpack.c.l.b16 %v117
    %v638 = vunpack.c.l.b16 %v118
    %v639 = vunpack.c.l.b16 %v119
    %v640 = vunpack.c.l.b16 %v120
    %v641 = vunpack.c.l.b16 %v121
    %v642 = vunpack.c.l.b16 %v122
    %v643 = vunpack.c.l.b16 %v123
    %v644 = vunpack.c.l.b16 %v124
    %v645 = vunpack.c.l.b16 %v125
    %v646 = vunpack.c.l.b16 %v126
    %v647 = vunpack.c.l.b16 %v127
    %v648 = vunpack.c.l.b16 %v128
    %v649 = vunpack.c.l.b16 %v129
    %v650 = vunpack.c.l.b16 %v130
    %v651 = vunpack.c.l.b16 %v131
    %v652 = vunpack.c.l.b16 %v132
    %v653 = vunpack.c.l.b16 %v133
    %v654 = vunpack.c.l.b16 %v134
    %v655 = vunpack.c.l.b16 %v135
    %v656 = vunpack.c.l.b16 %v136
    %v657 = vunpack.c.l.b16 %v137
    %v658 = vunpack.c.l.b16 %v138
    %v659 = vunpack.c.l.b16 %v139
    %v660 = vunpack.c.l.b16 %v140
    %v661 = vunpack.c.l.b16 %v141
    %v662 = vunpack.c.l.b16 %v142
    %v663 = vunpack.c.l.b16 %v143
    %v664 = vunpack.c.l.b16 %v144
    %v665 = vunpack.c.l.b16 %v145
    %v666 = vunpack.c.l.b16 %v146
    %v667 = vunpack.c.l.b16 %v147
    %v668 = vunpack.c.l.b16 %v148
    %v669 = vunpack.c.l.b16 %v149
    %v670 = vunpack.c.l.b16 %v150
    %v671 = vunpack.c.l.b16 %v151
    %v672 = vunpack.c.l.b16 %v152
    %v673 = vunpack.c.l.b16 %v153
    %v674 = vunpack.c.l.b16 %v154
    %v675 = vunpack.c.l.b16 %v155
    %v676 = vunpack.c.l.b16 %v156
    %v677 = vunpack.c.l.b16 %v157
    %v678 = vunpack.c.l.b16 %v158
    %v679 = vunpack.c.l.b16 %v159
    %v680 = vunpack.c.l.b16 %v160
    %v681 = vunpack.c.l.b16 %v161
    %v682 = vunpack.c.l.b16 %v162
    %v683 = vunpack.c.l.b16 %v163
    %v684 = vunpack.c.l.b16 %v164
    %v685 = vunpack.c.l.b16 %v165
    %v686 = vpack.c.b16 %v637, %v636
    %v687 = vpack.c.b16 %v639, %v638
    %v688 = vpack.c.b16 %v641, %v640
    %v689 = vpack.c.b16 %v643, %v642
    %v690 = vpack.c.b16 %v645, %v644
    %v691 = vpack.c.b16 %v647, %v646
    %v692 = vpack.c.b16 %v649, %v648
    %v693 = vpack.c.b16 %v651, %v650
    %v694 = vpack.c.b16 %v653, %v652
    %v695 = vpack.c.b16 %v655, %v654
    %v696 = vpack.c.b16 %v657, %v656
    %v697 = vpack.c.b16 %v659, %v658
    %v698 = vpack.c.b16 %v661, %v660
    %v699 = vpack.c.b16 %v663, %v662
    %v700 = vpack.c.b16 %v665, %v664
    %v701 = vpack.c.b16 %v667, %v666
    %v702 = vpack.c.b16 %v669, %v668
    %v703 = vpack.c.b16 %v671, %v670
    %v704 = vpack.c.b16 %v673, %v672
    %v705 = vpack.c.b16 %v675, %v674
    %v706 = vpack.c.b16 %v677, %v676
    %v707 = vpack.c.b16 %v679, %v678
    %v708 = vpack.c.b16 %v681, %v680
    %v709 = vpack.c.b16 %v683, %v682
    %v710 = vpack.c.b16 %v685, %v684
    %vm736 = vcmask 130048
    %v738 = vsel %vm736, %v435, 0
    %v741 = vsel %vm736, %v439, 0
    %v744 = vsel %vm736, %v443, 0
    %v747 = vsel %vm736, %v447, 0
    %v750 = vsel %vm736, %v451, 0
    %v753 = vsel %vm736, %v455, 0
    %v756 = vsel %vm736, %v459, 0
    %v759 = vsel %vm736, %v463, 0
    %v762 = vsel %vm736, %v467, 0
    %v765 = vsel %vm736, %v471, 0
    %v768 = vsel %vm736, %v475, 0
    %v771 = vsel %vm736, %v479, 0
    %v774 = vsel %vm736, %v483, 0
    %v777 = vsel %vm736, %v487, 0
    %v780 = vsel %vm736, %v491, 0
    %v783 = vsel %vm736, %v495, 0
    %v786 = vsel %vm736, %v499, 0
    %v789 = vsel %vm736, %v503, 0
    %v792 = vsel %vm736, %v507, 0
    %v795 = vsel %vm736, %v511, 0
    %v798 = vsel %vm736, %v515, 0
    %v801 = vsel %vm736, %v519, 0
    %803 = vmatpush.bf16.msra.mxu0 %v693
    %804 = vmatpush.bf16.msra.mxu0 %v692
    %805 = vmatpush.bf16.msra.mxu0 %v691
    %806 = vmatpush.bf16.msra.mxu0 %v690
    %807 = vmatpush.bf16.msra.mxu0 %v689
    %808 = vmatpush.bf16.msra.mxu0 %v688
    %809 = vmatpush.bf16.msra.mxu0 %v687
    %810 = vmatpush.bf16.msra.mxu0 %v686
    %811 = vmatmul.bf16.gmra.mxu0 %v432
    %v812 = vpop.f32.mrf.mxu0
    %v813 = vadd.f32 %v167, %v812
    %v814 = vpop.f32.mrf.mxu0
    %v815 = vadd.f32 %v167, %v814
    %816 = vmatmul.bf16.gmra.mxu0 %v436
    %v817 = vpop.f32.mrf.mxu0
    %v818 = vadd.f32 %v167, %v817
    %v819 = vpop.f32.mrf.mxu0
    %v820 = vadd.f32 %v167, %v819
    %821 = vmatmul.bf16.gmra.mxu0 %v440
    %v822 = vpop.f32.mrf.mxu0
    %v823 = vadd.f32 %v167, %v822
    %v824 = vpop.f32.mrf.mxu0
    %v825 = vadd.f32 %v167, %v824
    %826 = vmatmul.bf16.gmra.mxu0 %v444
    %v827 = vpop.f32.mrf.mxu0
    %v828 = vadd.f32 %v167, %v827
    %v829 = vpop.f32.mrf.mxu0
    %v830 = vadd.f32 %v167, %v829
    %831 = vmatmul.bf16.gmra.mxu0 %v448
    %v832 = vpop.f32.mrf.mxu0
    %v833 = vadd.f32 %v167, %v832
    %v834 = vpop.f32.mrf.mxu0
    %v835 = vadd.f32 %v167, %v834
    %836 = vmatmul.bf16.gmra.mxu0 %v452
    %v837 = vpop.f32.mrf.mxu0
    %v838 = vadd.f32 %v167, %v837
    %v839 = vpop.f32.mrf.mxu0
    %v840 = vadd.f32 %v167, %v839
    %841 = vmatmul.bf16.gmra.mxu0 %v456
    %v842 = vpop.f32.mrf.mxu0
    %v843 = vadd.f32 %v167, %v842
    %v844 = vpop.f32.mrf.mxu0
    %v845 = vadd.f32 %v167, %v844
    %846 = vmatmul.bf16.gmra.mxu0 %v460
    %v847 = vpop.f32.mrf.mxu0
    %v848 = vadd.f32 %v167, %v847
    %v849 = vpop.f32.mrf.mxu0
    %v850 = vadd.f32 %v167, %v849
    %851 = vmatmul.bf16.gmra.mxu0 %v464
    %v852 = vpop.f32.mrf.mxu0
    %v853 = vadd.f32 %v167, %v852
    %v854 = vpop.f32.mrf.mxu0
    %v855 = vadd.f32 %v167, %v854
    %856 = vmatmul.bf16.gmra.mxu0 %v468
    %v857 = vpop.f32.mrf.mxu0
    %v858 = vadd.f32 %v167, %v857
    %v859 = vpop.f32.mrf.mxu0
    %v860 = vadd.f32 %v167, %v859
    %861 = vmatmul.bf16.gmra.mxu0 %v472
    %v862 = vpop.f32.mrf.mxu0
    %v863 = vadd.f32 %v167, %v862
    %v864 = vpop.f32.mrf.mxu0
    %v865 = vadd.f32 %v167, %v864
    %866 = vmatmul.bf16.gmra.mxu0 %v476
    %v867 = vpop.f32.mrf.mxu0
    %v868 = vadd.f32 %v167, %v867
    %v869 = vpop.f32.mrf.mxu0
    %v870 = vadd.f32 %v167, %v869
    %871 = vmatmul.bf16.gmra.mxu0 %v480
    %v872 = vpop.f32.mrf.mxu0
    %v873 = vadd.f32 %v167, %v872
    %v874 = vpop.f32.mrf.mxu0
    %v875 = vadd.f32 %v167, %v874
    %876 = vmatmul.bf16.gmra.mxu0 %v484
    %v877 = vpop.f32.mrf.mxu0
    %v878 = vadd.f32 %v167, %v877
    %v879 = vpop.f32.mrf.mxu0
    %v880 = vadd.f32 %v167, %v879
    %881 = vmatmul.bf16.gmra.mxu0 %v488
    %v882 = vpop.f32.mrf.mxu0
    %v883 = vadd.f32 %v167, %v882
    %v884 = vpop.f32.mrf.mxu0
    %v885 = vadd.f32 %v167, %v884
    %886 = vmatmul.bf16.gmra.mxu0 %v492
    %v887 = vpop.f32.mrf.mxu0
    %v888 = vadd.f32 %v167, %v887
    %v889 = vpop.f32.mrf.mxu0
    %v890 = vadd.f32 %v167, %v889
    %891 = vmatmul.bf16.gmra.mxu0 %v496
    %v892 = vpop.f32.mrf.mxu0
    %v893 = vadd.f32 %v167, %v892
    %v894 = vpop.f32.mrf.mxu0
    %v895 = vadd.f32 %v167, %v894
    %896 = vmatmul.bf16.gmra.mxu0 %v500
    %v897 = vpop.f32.mrf.mxu0
    %v898 = vadd.f32 %v167, %v897
    %v899 = vpop.f32.mrf.mxu0
    %v900 = vadd.f32 %v167, %v899
    %901 = vmatmul.bf16.gmra.mxu0 %v504
    %v902 = vpop.f32.mrf.mxu0
    %v903 = vadd.f32 %v167, %v902
    %v904 = vpop.f32.mrf.mxu0
    %v905 = vadd.f32 %v167, %v904
    %906 = vmatmul.bf16.gmra.mxu0 %v508
    %v907 = vpop.f32.mrf.mxu0
    %v908 = vadd.f32 %v167, %v907
    %v909 = vpop.f32.mrf.mxu0
    %v910 = vadd.f32 %v167, %v909
    %911 = vmatmul.bf16.gmra.mxu0 %v512
    %v912 = vpop.f32.mrf.mxu0
    %v913 = vadd.f32 %v167, %v912
    %v914 = vpop.f32.mrf.mxu0
    %v915 = vadd.f32 %v167, %v914
    %916 = vmatmul.bf16.gmra.mxu0 %v516
    %v917 = vpop.f32.mrf.mxu0
    %v918 = vadd.f32 %v167, %v917
    %v919 = vpop.f32.mrf.mxu0
    %v920 = vadd.f32 %v167, %v919
    %921 = vdwg.mxu0
    %922 = vmatpush.bf16.msra.mxu0 %v701
    %923 = vmatpush.bf16.msra.mxu0 %v700
    %924 = vmatpush.bf16.msra.mxu0 %v699
    %925 = vmatpush.bf16.msra.mxu0 %v698
    %926 = vmatpush.bf16.msra.mxu0 %v697
    %927 = vmatpush.bf16.msra.mxu0 %v696
    %928 = vmatpush.bf16.msra.mxu0 %v695
    %929 = vmatpush.bf16.msra.mxu0 %v694
    %930 = vmatmul.bf16.gmra.mxu0 %v433
    %v931 = vpop.f32.mrf.mxu0
    %v932 = vadd.f32 %v813, %v931
    %v933 = vpop.f32.mrf.mxu0
    %v934 = vadd.f32 %v815, %v933
    %935 = vmatmul.bf16.gmra.mxu0 %v437
    %v936 = vpop.f32.mrf.mxu0
    %v937 = vadd.f32 %v818, %v936
    %v938 = vpop.f32.mrf.mxu0
    %v939 = vadd.f32 %v820, %v938
    %940 = vmatmul.bf16.gmra.mxu0 %v441
    %v941 = vpop.f32.mrf.mxu0
    %v942 = vadd.f32 %v823, %v941
    %v943 = vpop.f32.mrf.mxu0
    %v944 = vadd.f32 %v825, %v943
    %945 = vmatmul.bf16.gmra.mxu0 %v445
    %v946 = vpop.f32.mrf.mxu0
    %v947 = vadd.f32 %v828, %v946
    %v948 = vpop.f32.mrf.mxu0
    %v949 = vadd.f32 %v830, %v948
    %950 = vmatmul.bf16.gmra.mxu0 %v449
    %v951 = vpop.f32.mrf.mxu0
    %v952 = vadd.f32 %v833, %v951
    %v953 = vpop.f32.mrf.mxu0
    %v954 = vadd.f32 %v835, %v953
    %955 = vmatmul.bf16.gmra.mxu0 %v453
    %v956 = vpop.f32.mrf.mxu0
    %v957 = vadd.f32 %v838, %v956
    %v958 = vpop.f32.mrf.mxu0
    %v959 = vadd.f32 %v840, %v958
    %960 = vmatmul.bf16.gmra.mxu0 %v457
    %v961 = vpop.f32.mrf.mxu0
    %v962 = vadd.f32 %v843, %v961
    %v963 = vpop.f32.mrf.mxu0
    %v964 = vadd.f32 %v845, %v963
    %965 = vmatmul.bf16.gmra.mxu0 %v461
    %v966 = vpop.f32.mrf.mxu0
    %v967 = vadd.f32 %v848, %v966
    %v968 = vpop.f32.mrf.mxu0
    %v969 = vadd.f32 %v850, %v968
    %970 = vmatmul.bf16.gmra.mxu0 %v465
    %v971 = vpop.f32.mrf.mxu0
    %v972 = vadd.f32 %v853, %v971
    %v973 = vpop.f32.mrf.mxu0
    %v974 = vadd.f32 %v855, %v973
    %975 = vmatmul.bf16.gmra.mxu0 %v469
    %v976 = vpop.f32.mrf.mxu0
    %v977 = vadd.f32 %v858, %v976
    %v978 = vpop.f32.mrf.mxu0
    %v979 = vadd.f32 %v860, %v978
    %980 = vmatmul.bf16.gmra.mxu0 %v473
    %v981 = vpop.f32.mrf.mxu0
    %v982 = vadd.f32 %v863, %v981
    %v983 = vpop.f32.mrf.mxu0
    %v984 = vadd.f32 %v865, %v983
    %985 = vmatmul.bf16.gmra.mxu0 %v477
    %v986 = vpop.f32.mrf.mxu0
    %v987 = vadd.f32 %v868, %v986
    %v988 = vpop.f32.mrf.mxu0
    %v989 = vadd.f32 %v870, %v988
    %990 = vmatmul.bf16.gmra.mxu0 %v481
    %v991 = vpop.f32.mrf.mxu0
    %v992 = vadd.f32 %v873, %v991
    %v993 = vpop.f32.mrf.mxu0
    %v994 = vadd.f32 %v875, %v993
    %995 = vmatmul.bf16.gmra.mxu0 %v485
    %v996 = vpop.f32.mrf.mxu0
    %v997 = vadd.f32 %v878, %v996
    %v998 = vpop.f32.mrf.mxu0
    %v999 = vadd.f32 %v880, %v998
    %1000 = vmatmul.bf16.gmra.mxu0 %v489
    %v1001 = vpop.f32.mrf.mxu0
    %v1002 = vadd.f32 %v883, %v1001
    %v1003 = vpop.f32.mrf.mxu0
    %v1004 = vadd.f32 %v885, %v1003
    %1005 = vmatmul.bf16.gmra.mxu0 %v493
    %v1006 = vpop.f32.mrf.mxu0
    %v1007 = vadd.f32 %v888, %v1006
    %v1008 = vpop.f32.mrf.mxu0
    %v1009 = vadd.f32 %v890, %v1008
    %1010 = vmatmul.bf16.gmra.mxu0 %v497
    %v1011 = vpop.f32.mrf.mxu0
    %v1012 = vadd.f32 %v893, %v1011
    %v1013 = vpop.f32.mrf.mxu0
    %v1014 = vadd.f32 %v895, %v1013
    %1015 = vmatmul.bf16.gmra.mxu0 %v501
    %v1016 = vpop.f32.mrf.mxu0
    %v1017 = vadd.f32 %v898, %v1016
    %v1018 = vpop.f32.mrf.mxu0
    %v1019 = vadd.f32 %v900, %v1018
    %1020 = vmatmul.bf16.gmra.mxu0 %v505
    %v1021 = vpop.f32.mrf.mxu0
    %v1022 = vadd.f32 %v903, %v1021
    %v1023 = vpop.f32.mrf.mxu0
    %v1024 = vadd.f32 %v905, %v1023
    %1025 = vmatmul.bf16.gmra.mxu0 %v509
    %v1026 = vpop.f32.mrf.mxu0
    %v1027 = vadd.f32 %v908, %v1026
    %v1028 = vpop.f32.mrf.mxu0
    %v1029 = vadd.f32 %v910, %v1028
    %1030 = vmatmul.bf16.gmra.mxu0 %v513
    %v1031 = vpop.f32.mrf.mxu0
    %v1032 = vadd.f32 %v913, %v1031
    %v1033 = vpop.f32.mrf.mxu0
    %v1034 = vadd.f32 %v915, %v1033
    %1035 = vmatmul.bf16.gmra.mxu0 %v517
    %v1036 = vpop.f32.mrf.mxu0
    %v1037 = vadd.f32 %v918, %v1036
    %v1038 = vpop.f32.mrf.mxu0
    %v1039 = vadd.f32 %v920, %v1038
    %1040 = vdwg.mxu0
    %1041 = vmatpush.bf16.msra.mxu0 %v709
    %1042 = vmatpush.bf16.msra.mxu0 %v708
    %1043 = vmatpush.bf16.msra.mxu0 %v707
    %1044 = vmatpush.bf16.msra.mxu0 %v706
    %1045 = vmatpush.bf16.msra.mxu0 %v705
    %1046 = vmatpush.bf16.msra.mxu0 %v704
    %1047 = vmatpush.bf16.msra.mxu0 %v703
    %1048 = vmatpush.bf16.msra.mxu0 %v702
    %1049 = vmatmul.bf16.gmra.mxu0 %v434
    %v1050 = vpop.f32.mrf.mxu0
    %v1051 = vadd.f32 %v932, %v1050
    %v1052 = vpop.f32.mrf.mxu0
    %v1053 = vadd.f32 %v934, %v1052
    %1054 = vmatmul.bf16.gmra.mxu0 %v438
    %v1055 = vpop.f32.mrf.mxu0
    %v1056 = vadd.f32 %v937, %v1055
    %v1057 = vpop.f32.mrf.mxu0
    %v1058 = vadd.f32 %v939, %v1057
    %1059 = vmatmul.bf16.gmra.mxu0 %v442
    %v1060 = vpop.f32.mrf.mxu0
    %v1061 = vadd.f32 %v942, %v1060
    %v1062 = vpop.f32.mrf.mxu0
    %v1063 = vadd.f32 %v944, %v1062
    %1064 = vmatmul.bf16.gmra.mxu0 %v446
    %v1065 = vpop.f32.mrf.mxu0
    %v1066 = vadd.f32 %v947, %v1065
    %v1067 = vpop.f32.mrf.mxu0
    %v1068 = vadd.f32 %v949, %v1067
    %1069 = vmatmul.bf16.gmra.mxu0 %v450
    %v1070 = vpop.f32.mrf.mxu0
    %v1071 = vadd.f32 %v952, %v1070
    %v1072 = vpop.f32.mrf.mxu0
    %v1073 = vadd.f32 %v954, %v1072
    %1074 = vmatmul.bf16.gmra.mxu0 %v454
    %v1075 = vpop.f32.mrf.mxu0
    %v1076 = vadd.f32 %v957, %v1075
    %v1077 = vpop.f32.mrf.mxu0
    %v1078 = vadd.f32 %v959, %v1077
    %1079 = vmatmul.bf16.gmra.mxu0 %v458
    %v1080 = vpop.f32.mrf.mxu0
    %v1081 = vadd.f32 %v962, %v1080
    %v1082 = vpop.f32.mrf.mxu0
    %v1083 = vadd.f32 %v964, %v1082
    %1084 = vmatmul.bf16.gmra.mxu0 %v462
    %v1085 = vpop.f32.mrf.mxu0
    %v1086 = vadd.f32 %v967, %v1085
    %v1087 = vpop.f32.mrf.mxu0
    %v1088 = vadd.f32 %v969, %v1087
    %1089 = vmatmul.bf16.gmra.mxu0 %v466
    %v1090 = vpop.f32.mrf.mxu0
    %v1091 = vadd.f32 %v972, %v1090
    %v1092 = vpop.f32.mrf.mxu0
    %v1093 = vadd.f32 %v974, %v1092
    %1094 = vmatmul.bf16.gmra.mxu0 %v470
    %v1095 = vpop.f32.mrf.mxu0
    %v1096 = vadd.f32 %v977, %v1095
    %v1097 = vpop.f32.mrf.mxu0
    %v1098 = vadd.f32 %v979, %v1097
    %1099 = vmatmul.bf16.gmra.mxu0 %v474
    %v1100 = vpop.f32.mrf.mxu0
    %v1101 = vadd.f32 %v982, %v1100
    %v1102 = vpop.f32.mrf.mxu0
    %v1103 = vadd.f32 %v984, %v1102
    %1104 = vmatmul.bf16.gmra.mxu0 %v478
    %v1105 = vpop.f32.mrf.mxu0
    %v1106 = vadd.f32 %v987, %v1105
    %v1107 = vpop.f32.mrf.mxu0
    %v1108 = vadd.f32 %v989, %v1107
    %1109 = vmatmul.bf16.gmra.mxu0 %v482
    %v1110 = vpop.f32.mrf.mxu0
    %v1111 = vadd.f32 %v992, %v1110
    %v1112 = vpop.f32.mrf.mxu0
    %v1113 = vadd.f32 %v994, %v1112
    %1114 = vmatmul.bf16.gmra.mxu0 %v486
    %v1115 = vpop.f32.mrf.mxu0
    %v1116 = vadd.f32 %v997, %v1115
    %v1117 = vpop.f32.mrf.mxu0
    %v1118 = vadd.f32 %v999, %v1117
    %1119 = vmatmul.bf16.gmra.mxu0 %v490
    %v1120 = vpop.f32.mrf.mxu0
    %v1121 = vadd.f32 %v1002, %v1120
    %v1122 = vpop.f32.mrf.mxu0
    %v1123 = vadd.f32 %v1004, %v1122
    %1124 = vmatmul.bf16.gmra.mxu0 %v494
    %v1125 = vpop.f32.mrf.mxu0
    %v1126 = vadd.f32 %v1007, %v1125
    %v1127 = vpop.f32.mrf.mxu0
    %v1128 = vadd.f32 %v1009, %v1127
    %1129 = vmatmul.bf16.gmra.mxu0 %v498
    %v1130 = vpop.f32.mrf.mxu0
    %v1131 = vadd.f32 %v1012, %v1130
    %v1132 = vpop.f32.mrf.mxu0
    %v1133 = vadd.f32 %v1014, %v1132
    %1134 = vmatmul.bf16.gmra.mxu0 %v502
    %v1135 = vpop.f32.mrf.mxu0
    %v1136 = vadd.f32 %v1017, %v1135
    %v1137 = vpop.f32.mrf.mxu0
    %v1138 = vadd.f32 %v1019, %v1137
    %1139 = vmatmul.bf16.gmra.mxu0 %v506
    %v1140 = vpop.f32.mrf.mxu0
    %v1141 = vadd.f32 %v1022, %v1140
    %v1142 = vpop.f32.mrf.mxu0
    %v1143 = vadd.f32 %v1024, %v1142
    %1144 = vmatmul.bf16.gmra.mxu0 %v510
    %v1145 = vpop.f32.mrf.mxu0
    %v1146 = vadd.f32 %v1027, %v1145
    %v1147 = vpop.f32.mrf.mxu0
    %v1148 = vadd.f32 %v1029, %v1147
    %1149 = vmatmul.bf16.gmra.mxu0 %v514
    %v1150 = vpop.f32.mrf.mxu0
    %v1151 = vadd.f32 %v1032, %v1150
    %v1152 = vpop.f32.mrf.mxu0
    %v1153 = vadd.f32 %v1034, %v1152
    %1154 = vmatmul.bf16.gmra.mxu0 %v518
    %v1155 = vpop.f32.mrf.mxu0
    %v1156 = vadd.f32 %v1037, %v1155
    %v1157 = vpop.f32.mrf.mxu0
    %v1158 = vadd.f32 %v1039, %v1157
    %1159 = vdwg.mxu0
    %1160 = vmatpush.bf16.msra.mxu0 0
    %1161 = vmatpush.bf16.msra.mxu0 0
    %1162 = vmatpush.bf16.msra.mxu0 0
    %1163 = vmatpush.bf16.msra.mxu0 0
    %1164 = vmatpush.bf16.msra.mxu0 0
    %1165 = vmatpush.bf16.msra.mxu0 0
    %1166 = vmatpush.bf16.msra.mxu0 0
    %1167 = vmatpush.bf16.msra.mxu0 %v710
    %1168 = vmatmul.bf16.gmra.mxu0 %v738
    %v1169 = vpop.f32.mrf.mxu0
    %v1170 = vadd.f32 %v1051, %v1169
    %v1171 = vpop.f32.mrf.mxu0
    %v1172 = vadd.f32 %v1053, %v1171
    %1173 = vmatmul.bf16.gmra.mxu0 %v741
    %v1174 = vpop.f32.mrf.mxu0
    %v1175 = vadd.f32 %v1056, %v1174
    %v1176 = vpop.f32.mrf.mxu0
    %v1177 = vadd.f32 %v1058, %v1176
    %1178 = vmatmul.bf16.gmra.mxu0 %v744
    %v1179 = vpop.f32.mrf.mxu0
    %v1180 = vadd.f32 %v1061, %v1179
    %v1181 = vpop.f32.mrf.mxu0
    %v1182 = vadd.f32 %v1063, %v1181
    %1183 = vmatmul.bf16.gmra.mxu0 %v747
    %v1184 = vpop.f32.mrf.mxu0
    %v1185 = vadd.f32 %v1066, %v1184
    %v1186 = vpop.f32.mrf.mxu0
    %v1187 = vadd.f32 %v1068, %v1186
    %1188 = vmatmul.bf16.gmra.mxu0 %v750
    %v1189 = vpop.f32.mrf.mxu0
    %v1190 = vadd.f32 %v1071, %v1189
    %v1191 = vpop.f32.mrf.mxu0
    %v1192 = vadd.f32 %v1073, %v1191
    %1193 = vmatmul.bf16.gmra.mxu0 %v753
    %v1194 = vpop.f32.mrf.mxu0
    %v1195 = vadd.f32 %v1076, %v1194
    %v1196 = vpop.f32.mrf.mxu0
    %v1197 = vadd.f32 %v1078, %v1196
    %1198 = vmatmul.bf16.gmra.mxu0 %v756
    %v1199 = vpop.f32.mrf.mxu0
    %v1200 = vadd.f32 %v1081, %v1199
    %v1201 = vpop.f32.mrf.mxu0
    %v1202 = vadd.f32 %v1083, %v1201
    %1203 = vmatmul.bf16.gmra.mxu0 %v759
    %v1204 = vpop.f32.mrf.mxu0
    %v1205 = vadd.f32 %v1086, %v1204
    %v1206 = vpop.f32.mrf.mxu0
    %v1207 = vadd.f32 %v1088, %v1206
    %1208 = vmatmul.bf16.gmra.mxu0 %v762
    %v1209 = vpop.f32.mrf.mxu0
    %v1210 = vadd.f32 %v1091, %v1209
    %v1211 = vpop.f32.mrf.mxu0
    %v1212 = vadd.f32 %v1093, %v1211
    %1213 = vmatmul.bf16.gmra.mxu0 %v765
    %v1214 = vpop.f32.mrf.mxu0
    %v1215 = vadd.f32 %v1096, %v1214
    %v1216 = vpop.f32.mrf.mxu0
    %v1217 = vadd.f32 %v1098, %v1216
    %1218 = vmatmul.bf16.gmra.mxu0 %v768
    %v1219 = vpop.f32.mrf.mxu0
    %v1220 = vadd.f32 %v1101, %v1219
    %v1221 = vpop.f32.mrf.mxu0
    %v1222 = vadd.f32 %v1103, %v1221
    %1223 = vmatmul.bf16.gmra.mxu0 %v771
    %v1224 = vpop.f32.mrf.mxu0
    %v1225 = vadd.f32 %v1106, %v1224
    %v1226 = vpop.f32.mrf.mxu0
    %v1227 = vadd.f32 %v1108, %v1226
    %1228 = vmatmul.bf16.gmra.mxu0 %v774
    %v1229 = vpop.f32.mrf.mxu0
    %v1230 = vadd.f32 %v1111, %v1229
    %v1231 = vpop.f32.mrf.mxu0
    %v1232 = vadd.f32 %v1113, %v1231
    %1233 = vmatmul.bf16.gmra.mxu0 %v777
    %v1234 = vpop.f32.mrf.mxu0
    %v1235 = vadd.f32 %v1116, %v1234
    %v1236 = vpop.f32.mrf.mxu0
    %v1237 = vadd.f32 %v1118, %v1236
    %1238 = vmatmul.bf16.gmra.mxu0 %v780
    %v1239 = vpop.f32.mrf.mxu0
    %v1240 = vadd.f32 %v1121, %v1239
    %v1241 = vpop.f32.mrf.mxu0
    %v1242 = vadd.f32 %v1123, %v1241
    %1243 = vmatmul.bf16.gmra.mxu0 %v783
    %v1244 = vpop.f32.mrf.mxu0
    %v1245 = vadd.f32 %v1126, %v1244
    %v1246 = vpop.f32.mrf.mxu0
    %v1247 = vadd.f32 %v1128, %v1246
    %1248 = vmatmul.bf16.gmra.mxu0 %v786
    %v1249 = vpop.f32.mrf.mxu0
    %v1250 = vadd.f32 %v1131, %v1249
    %v1251 = vpop.f32.mrf.mxu0
    %v1252 = vadd.f32 %v1133, %v1251
    %1253 = vmatmul.bf16.gmra.mxu0 %v789
    %v1254 = vpop.f32.mrf.mxu0
    %v1255 = vadd.f32 %v1136, %v1254
    %v1256 = vpop.f32.mrf.mxu0
    %v1257 = vadd.f32 %v1138, %v1256
    %1258 = vmatmul.bf16.gmra.mxu0 %v792
    %v1259 = vpop.f32.mrf.mxu0
    %v1260 = vadd.f32 %v1141, %v1259
    %v1261 = vpop.f32.mrf.mxu0
    %v1262 = vadd.f32 %v1143, %v1261
    %1263 = vmatmul.bf16.gmra.mxu0 %v795
    %v1264 = vpop.f32.mrf.mxu0
    %v1265 = vadd.f32 %v1146, %v1264
    %v1266 = vpop.f32.mrf.mxu0
    %v1267 = vadd.f32 %v1148, %v1266
    %1268 = vmatmul.bf16.gmra.mxu0 %v798
    %v1269 = vpop.f32.mrf.mxu0
    %v1270 = vadd.f32 %v1151, %v1269
    %v1271 = vpop.f32.mrf.mxu0
    %v1272 = vadd.f32 %v1153, %v1271
    %1273 = vmatmul.bf16.gmra.mxu0 %v801
    %v1274 = vpop.f32.mrf.mxu0
    %v1275 = vadd.f32 %v1156, %v1274
    %v1276 = vpop.f32.mrf.mxu0
    %v1277 = vadd.f32 %v1158, %v1276
    %1278 = vdwg.mxu0
    %v1279 = vld [vmem:[%s2 + $0x1] sm:$0x1]
    %v1280 = vperm.slane %v1279, 0
    %v1281 = vmul.f32 %v1170, %v1280
    %v1282 = vmul.f32 %v1172, %v1280
    %v1283 = vmul.f32 %v1175, %v1280
    %v1284 = vmul.f32 %v1177, %v1280
    %v1285 = vmul.f32 %v1180, %v1280
    %v1286 = vmul.f32 %v1182, %v1280
    %v1287 = vmul.f32 %v1185, %v1280
    %v1288 = vmul.f32 %v1187, %v1280
    %v1289 = vmul.f32 %v1190, %v1280
    %v1290 = vmul.f32 %v1192, %v1280
    %v1291 = vmul.f32 %v1195, %v1280
    %v1292 = vmul.f32 %v1197, %v1280
    %v1293 = vmul.f32 %v1200, %v1280
    %v1294 = vmul.f32 %v1202, %v1280
    %v1295 = vmul.f32 %v1205, %v1280
    %v1296 = vmul.f32 %v1207, %v1280
    %v1297 = vmul.f32 %v1210, %v1280
    %v1298 = vmul.f32 %v1212, %v1280
    %v1299 = vmul.f32 %v1215, %v1280
    %v1300 = vmul.f32 %v1217, %v1280
    %v1301 = vmul.f32 %v1220, %v1280
    %v1302 = vmul.f32 %v1222, %v1280
    %v1303 = vmul.f32 %v1225, %v1280
    %v1304 = vmul.f32 %v1227, %v1280
    %v1305 = vmul.f32 %v1230, %v1280
    %v1306 = vmul.f32 %v1232, %v1280
    %v1307 = vmul.f32 %v1235, %v1280
    %v1308 = vmul.f32 %v1237, %v1280
    %v1309 = vmul.f32 %v1240, %v1280
    %v1310 = vmul.f32 %v1242, %v1280
    %v1311 = vmul.f32 %v1245, %v1280
    %v1312 = vmul.f32 %v1247, %v1280
    %v1313 = vmul.f32 %v1250, %v1280
    %v1314 = vmul.f32 %v1252, %v1280
    %v1315 = vmul.f32 %v1255, %v1280
    %v1316 = vmul.f32 %v1257, %v1280
    %v1317 = vmul.f32 %v1260, %v1280
    %v1318 = vmul.f32 %v1262, %v1280
    %v1319 = vmul.f32 %v1265, %v1280
    %v1320 = vmul.f32 %v1267, %v1280
    %v1321 = vmul.f32 %v1270, %v1280
    %v1322 = vmul.f32 %v1272, %v1280
    %v1323 = vmul.f32 %v1275, %v1280
    %v1324 = vmul.f32 %v1277, %v1280
    %v1325 = vld [vmem:[%s2 + $0x2] sm:$0x1]
    %v1326 = vperm.slane %v1325, 0
    %v1327 = vadd.f32 %v1281, %v1326
    %v1328 = vadd.f32 %v1282, %v1326
    %v1329 = vadd.f32 %v1283, %v1326
    %v1330 = vadd.f32 %v1284, %v1326
    %v1331 = vadd.f32 %v1285, %v1326
    %v1332 = vadd.f32 %v1286, %v1326
    %v1333 = vadd.f32 %v1287, %v1326
    %v1334 = vadd.f32 %v1288, %v1326
    %v1335 = vadd.f32 %v1289, %v1326
    %v1336 = vadd.f32 %v1290, %v1326
    %v1337 = vadd.f32 %v1291, %v1326
    %v1338 = vadd.f32 %v1292, %v1326
    %v1339 = vadd.f32 %v1293, %v1326
    %v1340 = vadd.f32 %v1294, %v1326
    %v1341 = vadd.f32 %v1295, %v1326
    %v1342 = vadd.f32 %v1296, %v1326
    %v1343 = vadd.f32 %v1297, %v1326
    %v1344 = vadd.f32 %v1298, %v1326
    %v1345 = vadd.f32 %v1299, %v1326
    %v1346 = vadd.f32 %v1300, %v1326
    %v1347 = vadd.f32 %v1301, %v1326
    %v1348 = vadd.f32 %v1302, %v1326
    %v1349 = vadd.f32 %v1303, %v1326
    %v1350 = vadd.f32 %v1304, %v1326
    %v1351 = vadd.f32 %v1305, %v1326
    %v1352 = vadd.f32 %v1306, %v1326
    %v1353 = vadd.f32 %v1307, %v1326
    %v1354 = vadd.f32 %v1308, %v1326
    %v1355 = vadd.f32 %v1309, %v1326
    %v1356 = vadd.f32 %v1310, %v1326
    %v1357 = vadd.f32 %v1311, %v1326
    %v1358 = vadd.f32 %v1312, %v1326
    %v1359 = vadd.f32 %v1313, %v1326
    %v1360 = vadd.f32 %v1314, %v1326
    %v1361 = vadd.f32 %v1315, %v1326
    %v1362 = vadd.f32 %v1316, %v1326
    %v1363 = vadd.f32 %v1317, %v1326
    %v1364 = vadd.f32 %v1318, %v1326
    %v1365 = vadd.f32 %v1319, %v1326
    %v1366 = vadd.f32 %v1320, %v1326
    %v1367 = vadd.f32 %v1321, %v1326
    %v1368 = vadd.f32 %v1322, %v1326
    %v1369 = vadd.f32 %v1323, %v1326
    %v1370 = vadd.f32 %v1324, %v1326
    %vm1371 = vcmp.gt.f32.partialorder %v1327, 0.0
    %vm1372 = vcmp.gt.f32.partialorder %v1328, 0.0
    %vm1373 = vcmp.gt.f32.partialorder %v1329, 0.0
    %vm1374 = vcmp.gt.f32.partialorder %v1330, 0.0
    %vm1375 = vcmp.gt.f32.partialorder %v1331, 0.0
    %vm1376 = vcmp.gt.f32.partialorder %v1332, 0.0
    %vm1377 = vcmp.gt.f32.partialorder %v1333, 0.0
    %vm1378 = vcmp.gt.f32.partialorder %v1334, 0.0
    %vm1379 = vcmp.gt.f32.partialorder %v1335, 0.0
    %vm1380 = vcmp.gt.f32.partialorder %v1336, 0.0
    %vm1381 = vcmp.gt.f32.partialorder %v1337, 0.0
    %vm1382 = vcmp.gt.f32.partialorder %v1338, 0.0
    %vm1383 = vcmp.gt.f32.partialorder %v1339, 0.0
    %vm1384 = vcmp.gt.f32.partialorder %v1340, 0.0
    %vm1385 = vcmp.gt.f32.partialorder %v1341, 0.0
    %vm1386 = vcmp.gt.f32.partialorder %v1342, 0.0
    %vm1387 = vcmp.gt.f32.partialorder %v1343, 0.0
    %vm1388 = vcmp.gt.f32.partialorder %v1344, 0.0
    %vm1389 = vcmp.gt.f32.partialorder %v1345, 0.0
    %vm1390 = vcmp.gt.f32.partialorder %v1346, 0.0
    %vm1391 = vcmp.gt.f32.partialorder %v1347, 0.0
    %vm1392 = vcmp.gt.f32.partialorder %v1348, 0.0
    %vm1393 = vcmp.gt.f32.partialorder %v1349, 0.0
    %vm1394 = vcmp.gt.f32.partialorder %v1350, 0.0
    %vm1395 = vcmp.gt.f32.partialorder %v1351, 0.0
    %vm1396 = vcmp.gt.f32.partialorder %v1352, 0.0
    %vm1397 = vcmp.gt.f32.partialorder %v1353, 0.0
    %vm1398 = vcmp.gt.f32.partialorder %v1354, 0.0
    %vm1399 = vcmp.gt.f32.partialorder %v1355, 0.0
    %vm1400 = vcmp.gt.f32.partialorder %v1356, 0.0
    %vm1401 = vcmp.gt.f32.partialorder %v1357, 0.0
    %vm1402 = vcmp.gt.f32.partialorder %v1358, 0.0
    %vm1403 = vcmp.gt.f32.partialorder %v1359, 0.0
    %vm1404 = vcmp.gt.f32.partialorder %v1360, 0.0
    %vm1405 = vcmp.gt.f32.partialorder %v1361, 0.0
    %vm1406 = vcmp.gt.f32.partialorder %v1362, 0.0
    %vm1407 = vcmp.gt.f32.partialorder %v1363, 0.0
    %vm1408 = vcmp.gt.f32.partialorder %v1364, 0.0
    %vm1409 = vcmp.gt.f32.partialorder %v1365, 0.0
    %vm1410 = vcmp.gt.f32.partialorder %v1366, 0.0
    %vm1411 = vcmp.gt.f32.partialorder %v1367, 0.0
    %vm1412 = vcmp.gt.f32.partialorder %v1368, 0.0
    %vm1413 = vcmp.gt.f32.partialorder %v1369, 0.0
    %vm1414 = vcmp.gt.f32.partialorder %v1370, 0.0
    %v1415 = vmin.f32 %v1327, 0.0
    %v1416 = vmin.f32 %v1328, 0.0
    %v1417 = vmin.f32 %v1329, 0.0
    %v1418 = vmin.f32 %v1330, 0.0
    %v1419 = vmin.f32 %v1331, 0.0
    %v1420 = vmin.f32 %v1332, 0.0
    %v1421 = vmin.f32 %v1333, 0.0
    %v1422 = vmin.f32 %v1334, 0.0
    %v1423 = vmin.f32 %v1335, 0.0
    %v1424 = vmin.f32 %v1336, 0.0
    %v1425 = vmin.f32 %v1337, 0.0
    %v1426 = vmin.f32 %v1338, 0.0
    %v1427 = vmin.f32 %v1339, 0.0
    %v1428 = vmin.f32 %v1340, 0.0
    %v1429 = vmin.f32 %v1341, 0.0
    %v1430 = vmin.f32 %v1342, 0.0
    %v1431 = vmin.f32 %v1343, 0.0
    %v1432 = vmin.f32 %v1344, 0.0
    %v1433 = vmin.f32 %v1345, 0.0
    %v1434 = vmin.f32 %v1346, 0.0
    %v1435 = vmin.f32 %v1347, 0.0
    %v1436 = vmin.f32 %v1348, 0.0
    %v1437 = vmin.f32 %v1349, 0.0
    %v1438 = vmin.f32 %v1350, 0.0
    %v1439 = vmin.f32 %v1351, 0.0
    %v1440 = vmin.f32 %v1352, 0.0
    %v1441 = vmin.f32 %v1353, 0.0
    %v1442 = vmin.f32 %v1354, 0.0
    %v1443 = vmin.f32 %v1355, 0.0
    %v1444 = vmin.f32 %v1356, 0.0
    %v1445 = vmin.f32 %v1357, 0.0
    %v1446 = vmin.f32 %v1358, 0.0
    %v1447 = vmin.f32 %v1359, 0.0
    %v1448 = vmin.f32 %v1360, 0.0
    %v1449 = vmin.f32 %v1361, 0.0
    %v1450 = vmin.f32 %v1362, 0.0
    %v1451 = vmin.f32 %v1363, 0.0
    %v1452 = vmin.f32 %v1364, 0.0
    %v1453 = vmin.f32 %v1365, 0.0
    %v1454 = vmin.f32 %v1366, 0.0
    %v1455 = vmin.f32 %v1367, 0.0
    %v1456 = vmin.f32 %v1368, 0.0
    %v1457 = vmin.f32 %v1369, 0.0
    %v1458 = vmin.f32 %v1370, 0.0
    %v1459 = vmul.f32 %v1415, 1.442695
    %v1460 = vpow.pop %v1459
    %v1461 = vmul.f32 %v1416, 1.442695
    %v1462 = vpow.pop %v1461
    %v1463 = vmul.f32 %v1417, 1.442695
    %v1464 = vpow.pop %v1463
    %v1465 = vmul.f32 %v1418, 1.442695
    %v1466 = vpow.pop %v1465
    %v1467 = vmul.f32 %v1419, 1.442695
    %v1468 = vpow.pop %v1467
    %v1469 = vmul.f32 %v1420, 1.442695
    %v1470 = vpow.pop %v1469
    %v1471 = vmul.f32 %v1421, 1.442695
    %v1472 = vpow.pop %v1471
    %v1473 = vmul.f32 %v1422, 1.442695
    %v1474 = vpow.pop %v1473
    %v1475 = vmul.f32 %v1423, 1.442695
    %v1476 = vpow.pop %v1475
    %v1477 = vmul.f32 %v1424, 1.442695
    %v1478 = vpow.pop %v1477
    %v1479 = vmul.f32 %v1425, 1.442695
    %v1480 = vpow.pop %v1479
    %v1481 = vmul.f32 %v1426, 1.442695
    %v1482 = vpow.pop %v1481
    %v1483 = vmul.f32 %v1427, 1.442695
    %v1484 = vpow.pop %v1483
    %v1485 = vmul.f32 %v1428, 1.442695
    %v1486 = vpow.pop %v1485
    %v1487 = vmul.f32 %v1429, 1.442695
    %v1488 = vpow.pop %v1487
    %v1489 = vmul.f32 %v1430, 1.442695
    %v1490 = vpow.pop %v1489
    %v1491 = vmul.f32 %v1431, 1.442695
    %v1492 = vpow.pop %v1491
    %v1493 = vmul.f32 %v1432, 1.442695
    %v1494 = vpow.pop %v1493
    %v1495 = vmul.f32 %v1433, 1.442695
    %v1496 = vpow.pop %v1495
    %v1497 = vmul.f32 %v1434, 1.442695
    %v1498 = vpow.pop %v1497
    %v1499 = vmul.f32 %v1435, 1.442695
    %v1500 = vpow.pop %v1499
    %v1501 = vmul.f32 %v1436, 1.442695
    %v1502 = vpow.pop %v1501
    %v1503 = vmul.f32 %v1437, 1.442695
    %v1504 = vpow.pop %v1503
    %v1505 = vmul.f32 %v1438, 1.442695
    %v1506 = vpow.pop %v1505
    %v1507 = vmul.f32 %v1439, 1.442695
    %v1508 = vpow.pop %v1507
    %v1509 = vmul.f32 %v1440, 1.442695
    %v1510 = vpow.pop %v1509
    %v1511 = vmul.f32 %v1441, 1.442695
    %v1512 = vpow.pop %v1511
    %v1513 = vmul.f32 %v1442, 1.442695
    %v1514 = vpow.pop %v1513
    %v1515 = vmul.f32 %v1443, 1.442695
    %v1516 = vpow.pop %v1515
    %v1517 = vmul.f32 %v1444, 1.442695
    %v1518 = vpow.pop %v1517
    %v1519 = vmul.f32 %v1445, 1.442695
    %v1520 = vpow.pop %v1519
    %v1521 = vmul.f32 %v1446, 1.442695
    %v1522 = vpow.pop %v1521
    %v1523 = vmul.f32 %v1447, 1.442695
    %v1524 = vpow.pop %v1523
    %v1525 = vmul.f32 %v1448, 1.442695
    %v1526 = vpow.pop %v1525
    %v1527 = vmul.f32 %v1449, 1.442695
    %v1528 = vpow.pop %v1527
    %v1529 = vmul.f32 %v1450, 1.442695
    %v1530 = vpow.pop %v1529
    %v1531 = vmul.f32 %v1451, 1.442695
    %v1532 = vpow.pop %v1531
    %v1533 = vmul.f32 %v1452, 1.442695
    %v1534 = vpow.pop %v1533
    %v1535 = vmul.f32 %v1453, 1.442695
    %v1536 = vpow.pop %v1535
    %v1537 = vmul.f32 %v1454, 1.442695
    %v1538 = vpow.pop %v1537
    %v1539 = vmul.f32 %v1455, 1.442695
    %v1540 = vpow.pop %v1539
    %v1541 = vmul.f32 %v1456, 1.442695
    %v1542 = vpow.pop %v1541
    %v1543 = vmul.f32 %v1457, 1.442695
    %v1544 = vpow.pop %v1543
    %v1545 = vmul.f32 %v1458, 1.442695
    %v1546 = vpow.pop %v1545
    %v1547 = vsub.f32 %v1460, 1.0
    %v1548 = vsub.f32 %v1462, 1.0
    %v1549 = vsub.f32 %v1464, 1.0
    %v1550 = vsub.f32 %v1466, 1.0
    %v1551 = vsub.f32 %v1468, 1.0
    %v1552 = vsub.f32 %v1470, 1.0
    %v1553 = vsub.f32 %v1472, 1.0
    %v1554 = vsub.f32 %v1474, 1.0
    %v1555 = vsub.f32 %v1476, 1.0
    %v1556 = vsub.f32 %v1478, 1.0
    %v1557 = vsub.f32 %v1480, 1.0
    %v1558 = vsub.f32 %v1482, 1.0
    %v1559 = vsub.f32 %v1484, 1.0
    %v1560 = vsub.f32 %v1486, 1.0
    %v1561 = vsub.f32 %v1488, 1.0
    %v1562 = vsub.f32 %v1490, 1.0
    %v1563 = vsub.f32 %v1492, 1.0
    %v1564 = vsub.f32 %v1494, 1.0
    %v1565 = vsub.f32 %v1496, 1.0
    %v1566 = vsub.f32 %v1498, 1.0
    %v1567 = vsub.f32 %v1500, 1.0
    %v1568 = vsub.f32 %v1502, 1.0
    %v1569 = vsub.f32 %v1504, 1.0
    %v1570 = vsub.f32 %v1506, 1.0
    %v1571 = vsub.f32 %v1508, 1.0
    %v1572 = vsub.f32 %v1510, 1.0
    %v1573 = vsub.f32 %v1512, 1.0
    %v1574 = vsub.f32 %v1514, 1.0
    %v1575 = vsub.f32 %v1516, 1.0
    %v1576 = vsub.f32 %v1518, 1.0
    %v1577 = vsub.f32 %v1520, 1.0
    %v1578 = vsub.f32 %v1522, 1.0
    %v1579 = vsub.f32 %v1524, 1.0
    %v1580 = vsub.f32 %v1526, 1.0
    %v1581 = vsub.f32 %v1528, 1.0
    %v1582 = vsub.f32 %v1530, 1.0
    %v1583 = vsub.f32 %v1532, 1.0
    %v1584 = vsub.f32 %v1534, 1.0
    %v1585 = vsub.f32 %v1536, 1.0
    %v1586 = vsub.f32 %v1538, 1.0
    %v1587 = vsub.f32 %v1540, 1.0
    %v1588 = vsub.f32 %v1542, 1.0
    %v1589 = vsub.f32 %v1544, 1.0
    %v1590 = vsub.f32 %v1546, 1.0
    %v1591 = vsel %vm1371, %v1327, %v1547
    %v1592 = vsel %vm1372, %v1328, %v1548
    %v1593 = vsel %vm1373, %v1329, %v1549
    %v1594 = vsel %vm1374, %v1330, %v1550
    %v1595 = vsel %vm1375, %v1331, %v1551
    %v1596 = vsel %vm1376, %v1332, %v1552
    %v1597 = vsel %vm1377, %v1333, %v1553
    %v1598 = vsel %vm1378, %v1334, %v1554
    %v1599 = vsel %vm1379, %v1335, %v1555
    %v1600 = vsel %vm1380, %v1336, %v1556
    %v1601 = vsel %vm1381, %v1337, %v1557
    %v1602 = vsel %vm1382, %v1338, %v1558
    %v1603 = vsel %vm1383, %v1339, %v1559
    %v1604 = vsel %vm1384, %v1340, %v1560
    %v1605 = vsel %vm1385, %v1341, %v1561
    %v1606 = vsel %vm1386, %v1342, %v1562
    %v1607 = vsel %vm1387, %v1343, %v1563
    %v1608 = vsel %vm1388, %v1344, %v1564
    %v1609 = vsel %vm1389, %v1345, %v1565
    %v1610 = vsel %vm1390, %v1346, %v1566
    %v1611 = vsel %vm1391, %v1347, %v1567
    %v1612 = vsel %vm1392, %v1348, %v1568
    %v1613 = vsel %vm1393, %v1349, %v1569
    %v1614 = vsel %vm1394, %v1350, %v1570
    %v1615 = vsel %vm1395, %v1351, %v1571
    %v1616 = vsel %vm1396, %v1352, %v1572
    %v1617 = vsel %vm1397, %v1353, %v1573
    %v1618 = vsel %vm1398, %v1354, %v1574
    %v1619 = vsel %vm1399, %v1355, %v1575
    %v1620 = vsel %vm1400, %v1356, %v1576
    %v1621 = vsel %vm1401, %v1357, %v1577
    %v1622 = vsel %vm1402, %v1358, %v1578
    %v1623 = vsel %vm1403, %v1359, %v1579
    %v1624 = vsel %vm1404, %v1360, %v1580
    %v1625 = vsel %vm1405, %v1361, %v1581
    %v1626 = vsel %vm1406, %v1362, %v1582
    %v1627 = vsel %vm1407, %v1363, %v1583
    %v1628 = vsel %vm1408, %v1364, %v1584
    %v1629 = vsel %vm1409, %v1365, %v1585
    %v1630 = vsel %vm1410, %v1366, %v1586
    %v1631 = vsel %vm1411, %v1367, %v1587
    %v1632 = vsel %vm1412, %v1368, %v1588
    %v1633 = vsel %vm1413, %v1369, %v1589
    %v1634 = vsel %vm1414, %v1370, %v1590
    %v1635 = vpack.c.bf16 %v1592, %v1591
    %v1636 = vpack.c.bf16 %v1594, %v1593
    %v1637 = vpack.c.bf16 %v1596, %v1595
    %v1638 = vpack.c.bf16 %v1598, %v1597
    %v1639 = vpack.c.bf16 %v1600, %v1599
    %v1640 = vpack.c.bf16 %v1602, %v1601
    %v1641 = vpack.c.bf16 %v1604, %v1603
    %v1642 = vpack.c.bf16 %v1606, %v1605
    %v1643 = vpack.c.bf16 %v1608, %v1607
    %v1644 = vpack.c.bf16 %v1610, %v1609
    %v1645 = vpack.c.bf16 %v1612, %v1611
    %v1646 = vpack.c.bf16 %v1614, %v1613
    %v1647 = vpack.c.bf16 %v1616, %v1615
    %v1648 = vpack.c.bf16 %v1618, %v1617
    %v1649 = vpack.c.bf16 %v1620, %v1619
    %v1650 = vpack.c.bf16 %v1622, %v1621
    %v1651 = vpack.c.bf16 %v1624, %v1623
    %v1652 = vpack.c.bf16 %v1626, %v1625
    %v1653 = vpack.c.bf16 %v1628, %v1627
    %v1654 = vpack.c.bf16 %v1630, %v1629
    %v1655 = vpack.c.bf16 %v1632, %v1631
    %v1656 = vpack.c.bf16 %v1634, %v1633
    %v1657 = vld [vmem:[%s3] sm:$0xf]
    %v1658 = vld [vmem:[%s3 + $0x4] sm:$0xf]
    %v1659 = vld [vmem:[%s3 + $0x8] sm:$0xf]
    %v1660 = vld [vmem:[%s3 + $0xc] sm:$0xf]
    %v1661 = vld [vmem:[%s3 + $0x10] sm:$0xf]
    %v1667 = vunpack.c.l.b16 %v1657
    %v1668 = vunpack.c.l.b16 %v1658
    %v1669 = vunpack.c.l.b16 %v1659
    %v1670 = vunpack.c.l.b16 %v1660
    %v1671 = vunpack.c.l.b16 %v1661
    %v1672 = vpack.c.b16 %v1668, %v1667
    %v1673 = vpack.c.b16 %v1670, %v1669
    %v1674 = vpack.c.b16 %v1671, %v1671
    %vm1677 = vcmask 326656
    %v1679 = vsel %vm1677, %v1635, 0
    %v1682 = vsel %vm1677, %v1636, 0
    %v1685 = vsel %vm1677, %v1637, 0
    %v1688 = vsel %vm1677, %v1638, 0
    %v1691 = vsel %vm1677, %v1639, 0
    %v1694 = vsel %vm1677, %v1640, 0
    %v1697 = vsel %vm1677, %v1641, 0
    %v1700 = vsel %vm1677, %v1642, 0
    %v1703 = vsel %vm1677, %v1643, 0
    %v1706 = vsel %vm1677, %v1644, 0
    %v1709 = vsel %vm1677, %v1645, 0
    %v1712 = vsel %vm1677, %v1646, 0
    %v1715 = vsel %vm1677, %v1647, 0
    %v1718 = vsel %vm1677, %v1648, 0
    %v1721 = vsel %vm1677, %v1649, 0
    %v1724 = vsel %vm1677, %v1650, 0
    %v1727 = vsel %vm1677, %v1651, 0
    %v1730 = vsel %vm1677, %v1652, 0
    %v1733 = vsel %vm1677, %v1653, 0
    %v1736 = vsel %vm1677, %v1654, 0
    %v1739 = vsel %vm1677, %v1655, 0
    %v1742 = vsel %vm1677, %v1656, 0
    %vm1744 = vcmask 1043456
    %v1746 = vsel %vm1744, %v1674, 0
    %1748 = vmatpush.bf16.msra.mxu0 0
    %1749 = vmatpush.bf16.msra.mxu0 0
    %1750 = vmatpush.bf16.msra.mxu0 0
    %1751 = vmatpush.bf16.msra.mxu0 0
    %1752 = vmatpush.bf16.msra.mxu0 0
    %1753 = vmatpush.bf16.msra.mxu0 %v1746
    %1754 = vmatpush.bf16.msra.mxu0 %v1673
    %1755 = vmatpush.bf16.msra.mxu0 %v1672
    %1756 = vmatmul.bf16.gmra.mxu0 %v1679
    %v1757 = vpop.f32.mrf.mxu0
    %v1758 = vadd.f32 0.0, %v1757
    %v1759 = vpop.f32.mrf.mxu0
    %v1760 = vadd.f32 0.0, %v1759
    %1761 = vmatmul.bf16.gmra.mxu0 %v1682
    %v1762 = vpop.f32.mrf.mxu0
    %v1763 = vadd.f32 0.0, %v1762
    %v1764 = vpop.f32.mrf.mxu0
    %v1765 = vadd.f32 0.0, %v1764
    %1766 = vmatmul.bf16.gmra.mxu0 %v1685
    %v1767 = vpop.f32.mrf.mxu0
    %v1768 = vadd.f32 0.0, %v1767
    %v1769 = vpop.f32.mrf.mxu0
    %v1770 = vadd.f32 0.0, %v1769
    %1771 = vmatmul.bf16.gmra.mxu0 %v1688
    %v1772 = vpop.f32.mrf.mxu0
    %v1773 = vadd.f32 0.0, %v1772
    %v1774 = vpop.f32.mrf.mxu0
    %v1775 = vadd.f32 0.0, %v1774
    %1776 = vmatmul.bf16.gmra.mxu0 %v1691
    %v1777 = vpop.f32.mrf.mxu0
    %v1778 = vadd.f32 0.0, %v1777
    %v1779 = vpop.f32.mrf.mxu0
    %v1780 = vadd.f32 0.0, %v1779
    %1781 = vmatmul.bf16.gmra.mxu0 %v1694
    %v1782 = vpop.f32.mrf.mxu0
    %v1783 = vadd.f32 0.0, %v1782
    %v1784 = vpop.f32.mrf.mxu0
    %v1785 = vadd.f32 0.0, %v1784
    %1786 = vmatmul.bf16.gmra.mxu0 %v1697
    %v1787 = vpop.f32.mrf.mxu0
    %v1788 = vadd.f32 0.0, %v1787
    %v1789 = vpop.f32.mrf.mxu0
    %v1790 = vadd.f32 0.0, %v1789
    %1791 = vmatmul.bf16.gmra.mxu0 %v1700
    %v1792 = vpop.f32.mrf.mxu0
    %v1793 = vadd.f32 0.0, %v1792
    %v1794 = vpop.f32.mrf.mxu0
    %v1795 = vadd.f32 0.0, %v1794
    %1796 = vmatmul.bf16.gmra.mxu0 %v1703
    %v1797 = vpop.f32.mrf.mxu0
    %v1798 = vadd.f32 0.0, %v1797
    %v1799 = vpop.f32.mrf.mxu0
    %v1800 = vadd.f32 0.0, %v1799
    %1801 = vmatmul.bf16.gmra.mxu0 %v1706
    %v1802 = vpop.f32.mrf.mxu0
    %v1803 = vadd.f32 0.0, %v1802
    %v1804 = vpop.f32.mrf.mxu0
    %v1805 = vadd.f32 0.0, %v1804
    %1806 = vmatmul.bf16.gmra.mxu0 %v1709
    %v1807 = vpop.f32.mrf.mxu0
    %v1808 = vadd.f32 0.0, %v1807
    %v1809 = vpop.f32.mrf.mxu0
    %v1810 = vadd.f32 0.0, %v1809
    %1811 = vmatmul.bf16.gmra.mxu0 %v1712
    %v1812 = vpop.f32.mrf.mxu0
    %v1813 = vadd.f32 0.0, %v1812
    %v1814 = vpop.f32.mrf.mxu0
    %v1815 = vadd.f32 0.0, %v1814
    %1816 = vmatmul.bf16.gmra.mxu0 %v1715
    %v1817 = vpop.f32.mrf.mxu0
    %v1818 = vadd.f32 0.0, %v1817
    %v1819 = vpop.f32.mrf.mxu0
    %v1820 = vadd.f32 0.0, %v1819
    %1821 = vmatmul.bf16.gmra.mxu0 %v1718
    %v1822 = vpop.f32.mrf.mxu0
    %v1823 = vadd.f32 0.0, %v1822
    %v1824 = vpop.f32.mrf.mxu0
    %v1825 = vadd.f32 0.0, %v1824
    %1826 = vmatmul.bf16.gmra.mxu0 %v1721
    %v1827 = vpop.f32.mrf.mxu0
    %v1828 = vadd.f32 0.0, %v1827
    %v1829 = vpop.f32.mrf.mxu0
    %v1830 = vadd.f32 0.0, %v1829
    %1831 = vmatmul.bf16.gmra.mxu0 %v1724
    %v1832 = vpop.f32.mrf.mxu0
    %v1833 = vadd.f32 0.0, %v1832
    %v1834 = vpop.f32.mrf.mxu0
    %v1835 = vadd.f32 0.0, %v1834
    %1836 = vmatmul.bf16.gmra.mxu0 %v1727
    %v1837 = vpop.f32.mrf.mxu0
    %v1838 = vadd.f32 0.0, %v1837
    %v1839 = vpop.f32.mrf.mxu0
    %v1840 = vadd.f32 0.0, %v1839
    %1841 = vmatmul.bf16.gmra.mxu0 %v1730
    %v1842 = vpop.f32.mrf.mxu0
    %v1843 = vadd.f32 0.0, %v1842
    %v1844 = vpop.f32.mrf.mxu0
    %v1845 = vadd.f32 0.0, %v1844
    %1846 = vmatmul.bf16.gmra.mxu0 %v1733
    %v1847 = vpop.f32.mrf.mxu0
    %v1848 = vadd.f32 0.0, %v1847
    %v1849 = vpop.f32.mrf.mxu0
    %v1850 = vadd.f32 0.0, %v1849
    %1851 = vmatmul.bf16.gmra.mxu0 %v1736
    %v1852 = vpop.f32.mrf.mxu0
    %v1853 = vadd.f32 0.0, %v1852
    %v1854 = vpop.f32.mrf.mxu0
    %v1855 = vadd.f32 0.0, %v1854
    %1856 = vmatmul.bf16.gmra.mxu0 %v1739
    %v1857 = vpop.f32.mrf.mxu0
    %v1858 = vadd.f32 0.0, %v1857
    %v1859 = vpop.f32.mrf.mxu0
    %v1860 = vadd.f32 0.0, %v1859
    %1861 = vmatmul.bf16.gmra.mxu0 %v1742
    %v1862 = vpop.f32.mrf.mxu0
    %v1863 = vadd.f32 0.0, %v1862
    %v1864 = vpop.f32.mrf.mxu0
    %v1865 = vadd.f32 0.0, %v1864
    %1866 = vdwg.mxu0
    %v1867 = vld [vmem:[%s4] sm:$0xff]
    %v1868 = vld [vmem:[%s4 + $0x8] sm:$0xff]
    %v1869 = vld [vmem:[%s4 + $0x10] sm:$0xff]
    %v1870 = vld [vmem:[%s4 + $0x18] sm:$0xff]
    %v1871 = vld [vmem:[%s4 + $0x20] sm:$0xff]
    %v1872 = vld [vmem:[%s4 + $0x28] sm:$0xff]
    %v1873 = vld [vmem:[%s4 + $0x30] sm:$0xff]
    %v1874 = vld [vmem:[%s4 + $0x38] sm:$0xff]
    %v1875 = vld [vmem:[%s4 + $0x40] sm:$0xff]
    %v1876 = vld [vmem:[%s4 + $0x48] sm:$0xff]
    %v1877 = vld [vmem:[%s4 + $0x50] sm:$0xff]
    %v1878 = vld [vmem:[%s4 + $0x58] sm:$0xff]
    %v1879 = vld [vmem:[%s4 + $0x60] sm:$0xff]
    %v1880 = vld [vmem:[%s4 + $0x68] sm:$0xff]
    %v1881 = vld [vmem:[%s4 + $0x70] sm:$0xff]
    %v1882 = vld [vmem:[%s4 + $0x78] sm:$0xff]
    %v1883 = vld [vmem:[%s4 + $0x80] sm:$0xff]
    %v1884 = vld [vmem:[%s4 + $0x88] sm:$0xff]
    %v1885 = vld [vmem:[%s4 + $0x90] sm:$0xff]
    %v1886 = vld [vmem:[%s4 + $0x98] sm:$0xff]
    %v1887 = vld [vmem:[%s4 + $0xa0] sm:$0xff]
    %v1888 = vld [vmem:[%s4 + $0xa8] sm:$0xff]
    %v1889 = vld [vmem:[%s4 + $0xb0] sm:$0xff]
    %v1890 = vld [vmem:[%s4 + $0xb8] sm:$0xff]
    %v1891 = vld [vmem:[%s4 + $0xc0] sm:$0xff]
    %v1892 = vld [vmem:[%s4 + $0xc8] sm:$0xff]
    %v1893 = vld [vmem:[%s4 + $0xd0] sm:$0xff]
    %v1894 = vld [vmem:[%s4 + $0xd8] sm:$0xff]
    %v1895 = vld [vmem:[%s4 + $0xe0] sm:$0xff]
    %v1896 = vld [vmem:[%s4 + $0xe8] sm:$0xff]
    %v1897 = vld [vmem:[%s4 + $0xf0] sm:$0xff]
    %v1898 = vld [vmem:[%s4 + $0xf8] sm:$0xff]
    %v1899 = vld [vmem:[%s4 + $0x100] sm:$0xff]
    %v1900 = vld [vmem:[%s4 + $0x108] sm:$0xff]
    %v1901 = vld [vmem:[%s4 + $0x110] sm:$0xff]
    %v1902 = vld [vmem:[%s4 + $0x118] sm:$0xff]
    %v1903 = vld [vmem:[%s4 + $0x120] sm:$0xff]
    %v1904 = vld [vmem:[%s4 + $0x128] sm:$0xff]
    %v1905 = vld [vmem:[%s4 + $0x130] sm:$0xff]
    %v1906 = vld [vmem:[%s4 + $0x138] sm:$0xff]
    %v1907 = vld [vmem:[%s4 + $0x140] sm:$0xff]
    %v1908 = vld [vmem:[%s4 + $0x148] sm:$0xff]
    %v1909 = vld [vmem:[%s4 + $0x150] sm:$0xff]
    %v1910 = vld [vmem:[%s4 + $0x158] sm:$0xff]
    %v1911 = vmul.f32 %v1758, %v1867
    %v1912 = vmul.f32 %v1760, %v1868
    %v1913 = vmul.f32 %v1763, %v1869
    %v1914 = vmul.f32 %v1765, %v1870
    %v1915 = vmul.f32 %v1768, %v1871
    %v1916 = vmul.f32 %v1770, %v1872
    %v1917 = vmul.f32 %v1773, %v1873
    %v1918 = vmul.f32 %v1775, %v1874
    %v1919 = vmul.f32 %v1778, %v1875
    %v1920 = vmul.f32 %v1780, %v1876
    %v1921 = vmul.f32 %v1783, %v1877
    %v1922 = vmul.f32 %v1785, %v1878
    %v1923 = vmul.f32 %v1788, %v1879
    %v1924 = vmul.f32 %v1790, %v1880
    %v1925 = vmul.f32 %v1793, %v1881
    %v1926 = vmul.f32 %v1795, %v1882
    %v1927 = vmul.f32 %v1798, %v1883
    %v1928 = vmul.f32 %v1800, %v1884
    %v1929 = vmul.f32 %v1803, %v1885
    %v1930 = vmul.f32 %v1805, %v1886
    %v1931 = vmul.f32 %v1808, %v1887
    %v1932 = vmul.f32 %v1810, %v1888
    %v1933 = vmul.f32 %v1813, %v1889
    %v1934 = vmul.f32 %v1815, %v1890
    %v1935 = vmul.f32 %v1818, %v1891
    %v1936 = vmul.f32 %v1820, %v1892
    %v1937 = vmul.f32 %v1823, %v1893
    %v1938 = vmul.f32 %v1825, %v1894
    %v1939 = vmul.f32 %v1828, %v1895
    %v1940 = vmul.f32 %v1830, %v1896
    %v1941 = vmul.f32 %v1833, %v1897
    %v1942 = vmul.f32 %v1835, %v1898
    %v1943 = vmul.f32 %v1838, %v1899
    %v1944 = vmul.f32 %v1840, %v1900
    %v1945 = vmul.f32 %v1843, %v1901
    %v1946 = vmul.f32 %v1845, %v1902
    %v1947 = vmul.f32 %v1848, %v1903
    %v1948 = vmul.f32 %v1850, %v1904
    %v1949 = vmul.f32 %v1853, %v1905
    %v1950 = vmul.f32 %v1855, %v1906
    %v1951 = vmul.f32 %v1858, %v1907
    %v1952 = vmul.f32 %v1860, %v1908
    %v1953 = vmul.f32 %v1863, %v1909
    %v1954 = vmul.f32 %v1865, %v1910
    %v1955 = vld [vmem:[%s5] sm:$0x3f]
    %1957 = vst [vmem:[#allocation1] ss:$4 sm:$0xff] %v1955
    %v1958 = vld.sshfl [vmem:[#allocation1] sm:$0xff pattern:$0x73625140]
    %v1959 = vld.sshfl [vmem:[#allocation1 + $0x8] sm:$0xff pattern:$0x73625140]
    %v1960 = vld.sshfl [vmem:[#allocation1 + $0x10] sm:$0xff pattern:$0x73625140]
    %vm1963 = vcmask 785408
    %v1964 = vsel %vm1963, %v1960, 0
    %1966 = vmatpush.msra.mxu0 %v1926
    %1967 = vmatpush.msra.mxu0 %v1925
    %1968 = vmatpush.msra.mxu0 %v1924
    %1969 = vmatpush.msra.mxu0 %v1923
    %1970 = vmatpush.msra.mxu0 %v1922
    %1971 = vmatpush.msra.mxu0 %v1921
    %1972 = vmatpush.msra.mxu0 %v1920
    %1973 = vmatpush.msra.mxu0 %v1919
    %1974 = vmatpush.msra.mxu0 %v1918
    %1975 = vmatpush.msra.mxu0 %v1917
    %1976 = vmatpush.msra.mxu0 %v1916
    %1977 = vmatpush.msra.mxu0 %v1915
    %1978 = vmatpush.msra.mxu0 %v1914
    %1979 = vmatpush.msra.mxu0 %v1913
    %1980 = vmatpush.msra.mxu0 %v1912
    %1981 = vmatpush.msra.mxu0 %v1911
    %1982 = vmatmul.f32.gmra.mxu0 %v1958
    %v1983 = vpop.f32.mrf.mxu0
    %v1984 = vadd.f32 0.0, %v1983
    %1985 = vdwg.mxu0
    %1986 = vmatpush.msra.mxu0 %v1942
    %1987 = vmatpush.msra.mxu0 %v1941
    %1988 = vmatpush.msra.mxu0 %v1940
    %1989 = vmatpush.msra.mxu0 %v1939
    %1990 = vmatpush.msra.mxu0 %v1938
    %1991 = vmatpush.msra.mxu0 %v1937
    %1992 = vmatpush.msra.mxu0 %v1936
    %1993 = vmatpush.msra.mxu0 %v1935
    %1994 = vmatpush.msra.mxu0 %v1934
    %1995 = vmatpush.msra.mxu0 %v1933
    %1996 = vmatpush.msra.mxu0 %v1932
    %1997 = vmatpush.msra.mxu0 %v1931
    %1998 = vmatpush.msra.mxu0 %v1930
    %1999 = vmatpush.msra.mxu0 %v1929
    %2000 = vmatpush.msra.mxu0 %v1928
    %2001 = vmatpush.msra.mxu0 %v1927
    %2002 = vmatmul.f32.gmra.mxu0 %v1959
    %v2003 = vpop.f32.mrf.mxu0
    %v2004 = vadd.f32 %v1984, %v2003
    %2005 = vdwg.mxu0
    %2006 = vmatpush.msra.mxu0 0.0
    %2007 = vmatpush.msra.mxu0 0.0
    %2008 = vmatpush.msra.mxu0 0.0
    %2009 = vmatpush.msra.mxu0 0.0
    %2010 = vmatpush.msra.mxu0 %v1954
    %2011 = vmatpush.msra.mxu0 %v1953
    %2012 = vmatpush.msra.mxu0 %v1952
    %2013 = vmatpush.msra.mxu0 %v1951
    %2014 = vmatpush.msra.mxu0 %v1950
    %2015 = vmatpush.msra.mxu0 %v1949
    %2016 = vmatpush.msra.mxu0 %v1948
    %2017 = vmatpush.msra.mxu0 %v1947
    %2018 = vmatpush.msra.mxu0 %v1946
    %2019 = vmatpush.msra.mxu0 %v1945
    %2020 = vmatpush.msra.mxu0 %v1944
    %2021 = vmatpush.msra.mxu0 %v1943
    %2022 = vmatmul.f32.gmra.mxu0 %v1964
    %v2023 = vpop.f32.mrf.mxu0
    %v2024 = vadd.f32 %v2004, %v2023
    %2025 = vdwg.mxu0
    %v2026 = vld [vmem:[%s6] sm:$0xff]
    %v2027 = vld [vmem:[%s6 + $0x8] sm:$0xff]
    %v2028 = vld [vmem:[%s6 + $0x10] sm:$0xff]
    %v2029 = vld [vmem:[%s6 + $0x18] sm:$0xff]
    %v2030 = vld [vmem:[%s6 + $0x20] sm:$0xff]
    %v2031 = vld [vmem:[%s6 + $0x28] sm:$0xff]
    %v2032 = vld [vmem:[%s6 + $0x30] sm:$0xff]
    %v2033 = vld [vmem:[%s6 + $0x38] sm:$0xff]
    %v2034 = vld [vmem:[%s6 + $0x40] sm:$0xff]
    %v2035 = vld [vmem:[%s6 + $0x48] sm:$0xff]
    %v2036 = vld [vmem:[%s6 + $0x50] sm:$0xff]
    %v2037 = vld [vmem:[%s6 + $0x58] sm:$0xff]
    %v2038 = vld [vmem:[%s6 + $0x60] sm:$0xff]
    %v2039 = vld [vmem:[%s2 + $0x3] sm:$0x1]
    %v2040 = vperm.slane %v2039, 0
    %vm2041 = vcmask 850944
    %v2043 = vsel %vm2041, %v2024, 0
    %2045 = vmatpush.msra.mxu0 0.0
    %2046 = vmatpush.msra.mxu0 0.0
    %2047 = vmatpush.msra.mxu0 0.0
    %2048 = vmatpush.msra.mxu0 %v2038
    %2049 = vmatpush.msra.mxu0 %v2037
    %2050 = vmatpush.msra.mxu0 %v2036
    %2051 = vmatpush.msra.mxu0 %v2035
    %2052 = vmatpush.msra.mxu0 %v2034
    %2053 = vmatpush.msra.mxu0 %v2033
    %2054 = vmatpush.msra.mxu0 %v2032
    %2055 = vmatpush.msra.mxu0 %v2031
    %2056 = vmatpush.msra.mxu0 %v2030
    %2057 = vmatpush.msra.mxu0 %v2029
    %2058 = vmatpush.msra.mxu0 %v2028
    %2059 = vmatpush.msra.mxu0 %v2027
    %2060 = vmatpush.msra.mxu0 %v2026
    %2061 = vmatmul.f32.gmra.mxu0 %v2043
    %v2062 = vpop.f32.mrf.mxu0
    %v2063 = vadd.f32 %v2040, %v2062
    %2064 = vdwg.mxu0
    %vm2065 = vcmask 25600
    %2066 = vst.msk [vmem:[#allocation2] sm:$0x3] %vm2065, %v2063
    // Predicated region
    $region30: #{shallownet_forward.1} parent=1 // pred_check
      _
    $region31: #{shallownet_forward.1} parent=1 // pred_check_branch
      %2068 = sbr.rel (0) target = $region33
    $region32: #{shallownet_forward.1} parent=1 // pred_region
      %2070 = vsyncadd [#allocation3], 0
      %s2072 = sshll.u32 [#allocation2], 4
      %s2073 = int_to_ptr.vmem [resolvable:$true] %s2072
      %s2074 = sshll.u32 %s7, 4
      %s2075 = int_to_ptr.hbm [resolvable:$true] %s2074
      %2077 = dma.vmem_to_hbm [thread:$0]  %s2073, 32, %s2075, [#allocation3]
    $region33: #{shallownet_forward.1} parent=1 // pred_fallthru
      _
    // Predicated region
    $region34: #{shallownet_forward.1} parent=1 // pred_check
      _
    $region35: #{shallownet_forward.1} parent=1 // pred_check_branch
      %2079 = sbr.rel (0) target = $region37
    $region36: #{shallownet_forward.1} parent=1 // pred_region
      %2081 = dma.done [#allocation3], 32
    $region37: #{shallownet_forward.1} parent=1 // pred_fallthru
      _
    %2082 = vsyncpa [#allocation3], 1

</llo_original>
